<compile_context>
chip_gen: v6e
topology: v6e:2x2x1
jax: 0.10.0
libtpu: 0.0.40
codegen_flags: <defaults>
</compile_context>

<pallas_src>
import functools

import jax
import jax.numpy as jnp
from jax.experimental import pallas as pl
from jax.experimental.pallas import tpu as pltpu

IN_FEATURES = 291
HIDDEN = 12
DEFAULT_TILE_B = 8192  # multiple of 8; ~12 MiB/x buffer (291 -> 384 lanes) in VMEM


def _round_up(n, m):
    return ((n + m - 1) // m) * m


def accept_net_kernel(x_ref, w1_ref, b1_ref, w2_ref, b2_ref, o_ref):
    # Layer 1 on the MXU: [tb, 291] @ [291, 12] -> [tb, 12] (f32), bias + ReLU on VPU.
    h = jnp.dot(
        x_ref[...],
        w1_ref[...],
        preferred_element_type=jnp.float32,
        precision=jax.lax.Precision.HIGHEST,
    )
    h = jnp.maximum(h + b1_ref[...], 0.0)

    # Layer 2, transposed so the batch lands in lanes: contract w2 [1, 12] with
    # h [tb, 12] on their last dims (NT dot) -> y [1, tb], lane-dense.
    y = jax.lax.dot_general(
        w2_ref[...],
        h,
        dimension_numbers=(((1,), (1,)), ((), ())),
        preferred_element_type=jnp.float32,
        precision=jax.lax.Precision.HIGHEST,
    )
    # Scalar bias from SMEM, sigmoid on the EUP, dense (unmasked) lane stores.
    o_ref[...] = jax.nn.sigmoid(y + b2_ref[0, 0]).astype(o_ref.dtype)


@functools.partial(jax.jit, static_argnames=("tile_b",))
def accept_net_forward(x, w1, b1, w2, b2, *, tile_b=DEFAULT_TILE_B):
    """x: [B, 291] f32 -> [B, 1] f32 == sigmoid(relu(x @ W1 + b1) @ W2^T + b2)."""
    B, f_in = x.shape
    assert f_in == IN_FEATURES

    # Tile selection: multiple of 8 sublanes, aim for >= 4 grid steps (2 per
    # TensorCore on v7x, and enough steps for double-buffer overlap everywhere),
    # capped at tile_b so the double-buffered (tb, 384-lane) x stream fits VMEM.
    tb = min(tile_b, max(8, _round_up(pl.cdiv(B, 4), 8)))
    num_tiles = pl.cdiv(B, tb)
    grid = (num_tiles,)

    weight_bytes = (IN_FEATURES * HIDDEN + HIDDEN + HIDDEN + 1) * 4
    cost = pl.CostEstimate(
        flops=2 * B * (IN_FEATURES * HIDDEN + HIDDEN),
        transcendentals=B,  # one sigmoid per row
        bytes_accessed=B * IN_FEATURES * 4 + num_tiles * tb * 4 + weight_bytes,
    )

    out = pl.pallas_call(
        accept_net_kernel,
        # Lane-dense output: one (1, tb) row per grid step; reshaped/sliced below.
        out_shape=jax.ShapeDtypeStruct((num_tiles, tb), jnp.float32),
        grid=grid,
        in_specs=[
            # x: batch-tiled, auto-pipelined (double-buffered); last tile partial.
            pl.BlockSpec((tb, IN_FEATURES), lambda i: (i, 0)),
            # Weights / b1: constant index_map -> resident in VMEM across the grid.
            pl.BlockSpec((IN_FEATURES, HIDDEN), lambda i: (0, 0)),
            pl.BlockSpec((1, HIDDEN), lambda i: (0, 0)),
            pl.BlockSpec((1, HIDDEN), lambda i: (0, 0)),
            # b2: single scalar in SMEM.
            pl.BlockSpec(memory_space=pltpu.SMEM),
        ],
        out_specs=pl.BlockSpec((1, tb), lambda i: (i, 0)),
        compiler_params=pltpu.CompilerParams(
            dimension_semantics=("parallel",),   # v7x: shard batch tiles over 2 TCs
            vmem_limit_bytes=40 * 1024 * 1024,   # covers tb=8192 on every generation
        ),
        cost_estimate=cost,
    )(x, w1, b1, w2, b2)

    # Drop the tile padding rows (>= B) and restore the [B, 1] PyTorch shape.
    return out.reshape(-1)[:B].reshape(B, 1)


def init_params(key):
    """Deterministic init mimicking PyTorch nn.Linear default (U[-1/sqrt(fan_in), +])."""
    k1, k2, k3, k4 = jax.random.split(key, 4)
    bound1 = 1.0 / jnp.sqrt(jnp.float32(IN_FEATURES))
    bound2 = 1.0 / jnp.sqrt(jnp.float32(HIDDEN))
    w1 = jax.random.uniform(k1, (IN_FEATURES, HIDDEN), jnp.float32, -bound1, bound1)
    b1 = jax.random.uniform(k2, (1, HIDDEN), jnp.float32, -bound1, bound1)
    w2 = jax.random.uniform(k3, (1, HIDDEN), jnp.float32, -bound2, bound2)  # PyTorch (out, in)
    b2 = jax.random.uniform(k4, (1, 1), jnp.float32, -bound2, bound2)
    return w1, b1, w2, b2


if __name__ == "__main__":
    key = jax.random.PRNGKey(0)
    kx, kp = jax.random.split(key)

    w1, b1, w2, b2 = init_params(kp)

    def reference(xx):
        h = jnp.maximum(jnp.dot(xx, w1, precision=jax.lax.Precision.HIGHEST) + b1, 0.0)
        y = jnp.dot(h, w2.T, precision=jax.lax.Precision.HIGHEST) + b2
        return jax.nn.sigmoid(y)

    # Small batch.
    B = 8
    x = jax.random.normal(kx, (B, IN_FEATURES), jnp.float32)
    out = jax.block_until_ready(accept_net_forward(x, w1, b1, w2, b2))
    assert out.shape == (B, 1)
    assert jnp.allclose(out, reference(x), atol=1e-5, rtol=1e-5)

    # Ragged batch (not a multiple of the tile): exercises the partial last block
    # path that replaced the wrapper-side jnp.pad.
    B2 = 3000
    x2 = jax.random.normal(kx, (B2, IN_FEATURES), jnp.float32)
    out2 = jax.block_until_ready(accept_net_forward(x2, w1, b1, w2, b2))
    assert out2.shape == (B2, 1)
    assert jnp.allclose(out2, reference(x2), atol=1e-5, rtol=1e-5)

    print("KERNEL_OK")
</pallas_src>

<mosaic_0001>
module attributes {stable_mosaic.version = 11 : i64} {
  func.func @accept_net_kernel(%arg0: i32, %arg1: memref<8x291xf32, #tpu.memory_space<vmem>>, %arg2: memref<291x12xf32, #tpu.memory_space<vmem>>, %arg3: memref<1x12xf32, #tpu.memory_space<vmem>>, %arg4: memref<1x12xf32, #tpu.memory_space<vmem>>, %arg5: memref<1x1xf32, #tpu.memory_space<smem>>, %arg6: memref<1x8xf32, #tpu.memory_space<vmem>>) attributes {dimension_semantics = [#tpu.dimension_semantics<parallel>], iteration_bounds = array<i64: 1>, scalar_prefetch = 0 : i64, scratch_operands = 0 : i64, tpu.core_type = #tpu.core_type<tc>, window_params = [{transform_indices = @transform_0, window_bounds = array<i64: 8, 291>}, {pipeline_mode = #tpu.pipeline_mode<synchronous>, transform_indices = @transform_1, window_bounds = array<i64: 291, 12>}, {pipeline_mode = #tpu.pipeline_mode<synchronous>, transform_indices = @transform_2, window_bounds = array<i64: 1, 12>}, {pipeline_mode = #tpu.pipeline_mode<synchronous>, transform_indices = @transform_3, window_bounds = array<i64: 1, 12>}, {transform_indices = @transform_4, window_bounds = array<i64: 1, 1>}, {transform_indices = @transform_5, window_bounds = array<i64: 1, 8>}]} {
    %c0 = arith.constant 0 : index
    %c0_0 = arith.constant 0 : index
    %0 = vector.load %arg1[%c0, %c0_0] : memref<8x291xf32, #tpu.memory_space<vmem>>, vector<8x291xf32>
    %c0_1 = arith.constant 0 : index
    %c0_2 = arith.constant 0 : index
    %1 = vector.load %arg2[%c0_1, %c0_2] : memref<291x12xf32, #tpu.memory_space<vmem>>, vector<291x12xf32>
    %cst = arith.constant dense<0.000000e+00> : vector<8x12xf32>
    %2 = tpu.matmul %0, %1, %cst {dimension_numbers = #tpu.dot_dimension_numbers<[1], [0], [0], [1], [0, 0, 1, 1], [], []>, precision = #tpu.contract_precision<fp32>} : vector<8x291xf32>, vector<291x12xf32>, vector<8x12xf32> -> vector<8x12xf32>
    %c0_3 = arith.constant 0 : index
    %c0_4 = arith.constant 0 : index
    %3 = vector.load %arg3[%c0_3, %c0_4] : memref<1x12xf32, #tpu.memory_space<vmem>>, vector<1x12xf32>
    %4 = vector.broadcast %3 : vector<1x12xf32> to vector<8x12xf32>
    %5 = arith.addf %2, %4 : vector<8x12xf32>
    %cst_5 = arith.constant 0.000000e+00 : f32
    %6 = vector.broadcast %cst_5 : f32 to vector<8x12xf32>
    %7 = arith.maximumf %5, %6 : vector<8x12xf32>
    %c0_6 = arith.constant 0 : index
    %c0_7 = arith.constant 0 : index
    %8 = vector.load %arg4[%c0_6, %c0_7] : memref<1x12xf32, #tpu.memory_space<vmem>>, vector<1x12xf32>
    %cst_8 = arith.constant dense<0.000000e+00> : vector<1x8xf32>
    %9 = tpu.matmul %8, %7, %cst_8 {dimension_numbers = #tpu.dot_dimension_numbers<[1], [1], [0], [0], [0, 0, 1, 0], [], []>, precision = #tpu.contract_precision<fp32>} : vector<1x12xf32>, vector<8x12xf32>, vector<1x8xf32> -> vector<1x8xf32>
    %c0_9 = arith.constant 0 : index
    %c0_10 = arith.constant 0 : index
    %10 = memref.load %arg5[%c0_9, %c0_10] : memref<1x1xf32, #tpu.memory_space<smem>>
    %11 = vector.broadcast %10 : f32 to vector<1x8xf32>
    %12 = arith.addf %9, %11 : vector<1x8xf32>
    %13 = arith.negf %12 : vector<1x8xf32>
    %14 = math.exp %13 : vector<1x8xf32>
    %cst_11 = arith.constant 1.000000e+00 : f32
    %15 = vector.broadcast %cst_11 : f32 to vector<1x8xf32>
    %16 = arith.addf %15, %14 : vector<1x8xf32>
    %17 = arith.divf %15, %16 : vector<1x8xf32>
    %c0_12 = arith.constant 0 : index
    %c0_13 = arith.constant 0 : index
    %18 = vector.load %arg6[%c0_12, %c0_13] : memref<1x8xf32, #tpu.memory_space<vmem>>, vector<1x8xf32>
    tpu.vector_store %arg6[%c0_12, %c0_13], %17 {strides = array<i32>} : memref<1x8xf32, #tpu.memory_space<vmem>>, vector<1x8xf32>,
    return
  }
  func.func @transform_0(%arg0: i32) -> (i32, i32) {
    %c0_i32 = arith.constant 0 : i32
    %c0_i32_0 = arith.constant 0 : i32
    return %arg0, %c0_i32 : i32, i32
  }
  func.func @transform_1(%arg0: i32) -> (i32, i32) {
    %c0_i32 = arith.constant 0 : i32
    %c0_i32_0 = arith.constant 0 : i32
    %c0_i32_1 = arith.constant 0 : i32
    return %c0_i32, %c0_i32_0 : i32, i32
  }
  func.func @transform_2(%arg0: i32) -> (i32, i32) {
    %c0_i32 = arith.constant 0 : i32
    %c0_i32_0 = arith.constant 0 : i32
    %c0_i32_1 = arith.constant 0 : i32
    return %c0_i32, %c0_i32_0 : i32, i32
  }
  func.func @transform_3(%arg0: i32) -> (i32, i32) {
    %c0_i32 = arith.constant 0 : i32
    %c0_i32_0 = arith.constant 0 : i32
    %c0_i32_1 = arith.constant 0 : i32
    return %c0_i32, %c0_i32_0 : i32, i32
  }
  func.func @transform_4(%arg0: i32) -> (i32, i32) {
    %c0_i32 = arith.constant 0 : i32
    %c0_i32_0 = arith.constant 0 : i32
    %c0_i32_1 = arith.constant 0 : i32
    return %c0_i32, %c0_i32_0 : i32, i32
  }
  func.func @transform_5(%arg0: i32) -> (i32, i32) {
    %c0_i32 = arith.constant 0 : i32
    %c0_i32_0 = arith.constant 0 : i32
    return %arg0, %c0_i32 : i32, i32
  }
}

</mosaic_0001>

<llo_original>
// kernel: accept_net_forward.1
$region0: #{accept_net_forward.1}
  #allocation0 [shape = 'u32[]', space=smem, size = 0x4, offset = 0x4, fixed_abs, tag = 'smem constant byte address 0x4 - core index']
  #allocation1 [shape = 'u32[144,128]{1,0:T(1,128)}', space=vmem, size = 0x12000, scoped, tag = 'internal scratch']
  #allocation2 [shape = 'f32[1,1]{1,0:T(1,128)S(6)}', space=smem, size = 0x200, scoped, tag = 'scoped memory for accept_net_forward.1']
  %s0 = inlined_call_operand.vmem [shape: f32[8,291], index: 0, kind: input, shape index: {}]
  %s1 = inlined_call_operand.vmem [shape: f32[291,12], index: 1, kind: input, shape index: {}]
  %s2 = inlined_call_operand.vmem [shape: f32[1,12], index: 2, kind: input, shape index: {}]
  %s3 = inlined_call_operand.vmem [shape: f32[1,12], index: 3, kind: input, shape index: {}]
  %s4 = inlined_call_operand.<no memory space> [shape: f32[1,1], index: 4, kind: input, shape index: {}]
  %s5 = inlined_call_operand.hbm [shape: f32[1,8], index: 5, kind: output, shape index: {}]
  %s6 = sld [smem:[#allocation0]]
  $region30: #{accept_net_forward.1} parent=0
    _
  %s8 = ssub.s32 1, %s6
  %s9 = scalar_select 0, %s8, %s6
  %10 = sst [smem:[#allocation2]] %s4
  $region1: #{accept_net_forward.1} parent=0
    #allocation3 [shape = 'u8[512]{0}', space=vmem, size = 0x400, scoped, tag = 'output window, operand 0, single buffered']
    #allocation4 [shape = 's32[1]{0}', space=sflag, size = 0x4, scoped, tag = 'scoped memory for accept_net_forward.1']
    %11 = vsyncpa [#allocation4], 0
    // Predicated region
    $region2: #{accept_net_forward.1} parent=1 // pred_check
      _
    $region3: #{accept_net_forward.1} parent=1 // pred_check_branch
      %13 = sbr.rel (0) target = $region5
    $region4: #{accept_net_forward.1} parent=1 // pred_region
      _
    $region5: #{accept_net_forward.1} parent=1 // pred_fallthru
      _
    // Predicated region
    $region6: #{accept_net_forward.1} parent=1 // pred_check
      _
    $region7: #{accept_net_forward.1} parent=1 // pred_check_branch
      %15 = sbr.rel (0) target = $region9
    $region8: #{accept_net_forward.1} parent=1 // pred_region
      _
    $region9: #{accept_net_forward.1} parent=1 // pred_fallthru
      _
    // Predicated region
    $region10: #{accept_net_forward.1} parent=1 // pred_check
      _
    $region11: #{accept_net_forward.1} parent=1 // pred_check_branch
      %17 = sbr.rel (0) target = $region13
    $region12: #{accept_net_forward.1} parent=1 // pred_region
      _
    $region13: #{accept_net_forward.1} parent=1 // pred_fallthru
      _
    // Predicated region
    $region14: #{accept_net_forward.1} parent=1 // pred_check
      _
    $region15: #{accept_net_forward.1} parent=1 // pred_check_branch
      %19 = sbr.rel (0) target = $region17
    $region16: #{accept_net_forward.1} parent=1 // pred_region
      _
    $region17: #{accept_net_forward.1} parent=1 // pred_fallthru
      _
    // Predicated region
    $region18: #{accept_net_forward.1} parent=1 // pred_check
      _
    $region19: #{accept_net_forward.1} parent=1 // pred_check_branch
      %21 = sbr.rel (0) target = $region21
    $region20: #{accept_net_forward.1} parent=1 // pred_region
      _
    $region21: #{accept_net_forward.1} parent=1 // pred_fallthru
      _
    %v22 = vld [vmem:[%s0] sm:$0xff]
    %v23 = vld [vmem:[%s0 + $0x8] sm:$0xff]
    %v24 = vld [vmem:[%s0 + $0x10] sm:$0xff]
    %v25 = vld [vmem:[%s1] sm:$0xff]
    %v26 = vld [vmem:[%s1 + $0x8] sm:$0xff]
    %v27 = vld [vmem:[%s1 + $0x10] sm:$0xff]
    %v28 = vld [vmem:[%s1 + $0x18] sm:$0xff]
    %v29 = vld [vmem:[%s1 + $0x20] sm:$0xff]
    %v30 = vld [vmem:[%s1 + $0x28] sm:$0xff]
    %v31 = vld [vmem:[%s1 + $0x30] sm:$0xff]
    %v32 = vld [vmem:[%s1 + $0x38] sm:$0xff]
    %v33 = vld [vmem:[%s1 + $0x40] sm:$0xff]
    %v34 = vld [vmem:[%s1 + $0x48] sm:$0xff]
    %v35 = vld [vmem:[%s1 + $0x50] sm:$0xff]
    %v36 = vld [vmem:[%s1 + $0x58] sm:$0xff]
    %v37 = vld [vmem:[%s1 + $0x60] sm:$0xff]
    %v38 = vld [vmem:[%s1 + $0x68] sm:$0xff]
    %v39 = vld [vmem:[%s1 + $0x70] sm:$0xff]
    %v40 = vld [vmem:[%s1 + $0x78] sm:$0xff]
    %v41 = vld [vmem:[%s1 + $0x80] sm:$0xff]
    %v42 = vld [vmem:[%s1 + $0x88] sm:$0xff]
    %v43 = vld [vmem:[%s1 + $0x90] sm:$0xff]
    %v44 = vld [vmem:[%s1 + $0x98] sm:$0xff]
    %v45 = vld [vmem:[%s1 + $0xa0] sm:$0xff]
    %v46 = vld [vmem:[%s1 + $0xa8] sm:$0xff]
    %v47 = vld [vmem:[%s1 + $0xb0] sm:$0xff]
    %v48 = vld [vmem:[%s1 + $0xb8] sm:$0xff]
    %v49 = vld [vmem:[%s1 + $0xc0] sm:$0xff]
    %v50 = vld [vmem:[%s1 + $0xc8] sm:$0xff]
    %v51 = vld [vmem:[%s1 + $0xd0] sm:$0xff]
    %v52 = vld [vmem:[%s1 + $0xd8] sm:$0xff]
    %v53 = vld [vmem:[%s1 + $0xe0] sm:$0xff]
    %v54 = vld [vmem:[%s1 + $0xe8] sm:$0xff]
    %v55 = vld [vmem:[%s1 + $0xf0] sm:$0xff]
    %v56 = vld [vmem:[%s1 + $0xf8] sm:$0xff]
    %v57 = vld [vmem:[%s1 + $0x100] sm:$0xff]
    %v58 = vld [vmem:[%s1 + $0x108] sm:$0xff]
    %v59 = vld [vmem:[%s1 + $0x110] sm:$0xff]
    %v60 = vld [vmem:[%s1 + $0x118] sm:$0xff]
    %v61 = vld [vmem:[%s1 + $0x120] sm:$0x7]
    %v62 = vld [vmem:[%s2] sm:$0x1]
    %v64 = vlaneseq
    %v65 = vshrl.u32 %v64, 7
    %v66 = vsub.s32 0, %v65
    %v67 = vrot.slane %v62, %v66
    %vm69 = vcmask 285696
    %v71 = vsel %vm69, %v24, 0
    %vm73 = vcmask 1042432
    %v75 = vsel %vm73, %v61, 0
    %77 = vmatprep.subr.mxu0 0.0
    %v78 = vand.u32 %v40, 4294901760
    %79 = vmatpush1.msra.mxu0 %v78
    %80 = vmatprep.subr.mxu0 0.0
    %v81 = vand.u32 %v39, 4294901760
    %82 = vmatpush1.msra.mxu0 %v81
    %83 = vmatprep.subr.mxu0 0.0
    %v84 = vand.u32 %v38, 4294901760
    %85 = vmatpush1.msra.mxu0 %v84
    %86 = vmatprep.subr.mxu0 0.0
    %v87 = vand.u32 %v37, 4294901760
    %88 = vmatpush1.msra.mxu0 %v87
    %89 = vmatprep.subr.mxu0 0.0
    %v90 = vand.u32 %v36, 4294901760
    %91 = vmatpush1.msra.mxu0 %v90
    %92 = vmatprep.subr.mxu0 0.0
    %v93 = vand.u32 %v35, 4294901760
    %94 = vmatpush1.msra.mxu0 %v93
    %95 = vmatprep.subr.mxu0 0.0
    %v96 = vand.u32 %v34, 4294901760
    %97 = vmatpush1.msra.mxu0 %v96
    %98 = vmatprep.subr.mxu0 0.0
    %v99 = vand.u32 %v33, 4294901760
    %100 = vmatpush1.msra.mxu0 %v99
    %101 = vmatprep.subr.mxu0 0.0
    %v102 = vand.u32 %v32, 4294901760
    %103 = vmatpush1.msra.mxu0 %v102
    %104 = vmatprep.subr.mxu0 0.0
    %v105 = vand.u32 %v31, 4294901760
    %106 = vmatpush1.msra.mxu0 %v105
    %107 = vmatprep.subr.mxu0 0.0
    %v108 = vand.u32 %v30, 4294901760
    %109 = vmatpush1.msra.mxu0 %v108
    %110 = vmatprep.subr.mxu0 0.0
    %v111 = vand.u32 %v29, 4294901760
    %112 = vmatpush1.msra.mxu0 %v111
    %113 = vmatprep.subr.mxu0 0.0
    %v114 = vand.u32 %v28, 4294901760
    %115 = vmatpush1.msra.mxu0 %v114
    %116 = vmatprep.subr.mxu0 0.0
    %v117 = vand.u32 %v27, 4294901760
    %118 = vmatpush1.msra.mxu0 %v117
    %119 = vmatprep.subr.mxu0 0.0
    %v120 = vand.u32 %v26, 4294901760
    %121 = vmatpush1.msra.mxu0 %v120
    %122 = vmatprep.subr.mxu0 0.0
    %v123 = vand.u32 %v25, 4294901760
    %124 = vmatpush1.msra.mxu0 %v123
    %125 = vmatprep.subr.mxu0 0.0
    %v126 = vand.u32 %v56, 4294901760
    %127 = vmatpush2.msra.mxu0 %v126
    %128 = vmatprep.subr.mxu0 0.0
    %v129 = vand.u32 %v55, 4294901760
    %130 = vmatpush2.msra.mxu0 %v129
    %131 = vmatprep.subr.mxu0 0.0
    %v132 = vand.u32 %v54, 4294901760
    %133 = vmatpush2.msra.mxu0 %v132
    %134 = vmatprep.subr.mxu0 0.0
    %v135 = vand.u32 %v53, 4294901760
    %136 = vmatpush2.msra.mxu0 %v135
    %137 = vmatprep.subr.mxu0 0.0
    %v138 = vand.u32 %v52, 4294901760
    %139 = vmatpush2.msra.mxu0 %v138
    %140 = vmatprep.subr.mxu0 0.0
    %v141 = vand.u32 %v51, 4294901760
    %142 = vmatpush2.msra.mxu0 %v141
    %143 = vmatprep.subr.mxu0 0.0
    %v144 = vand.u32 %v50, 4294901760
    %145 = vmatpush2.msra.mxu0 %v144
    %146 = vmatprep.subr.mxu0 0.0
    %v147 = vand.u32 %v49, 4294901760
    %148 = vmatpush2.msra.mxu0 %v147
    %149 = vmatprep.subr.mxu0 0.0
    %v150 = vand.u32 %v48, 4294901760
    %151 = vmatpush2.msra.mxu0 %v150
    %152 = vmatprep.subr.mxu0 0.0
    %v153 = vand.u32 %v47, 4294901760
    %154 = vmatpush2.msra.mxu0 %v153
    %155 = vmatprep.subr.mxu0 0.0
    %v156 = vand.u32 %v46, 4294901760
    %157 = vmatpush2.msra.mxu0 %v156
    %158 = vmatprep.subr.mxu0 0.0
    %v159 = vand.u32 %v45, 4294901760
    %160 = vmatpush2.msra.mxu0 %v159
    %161 = vmatprep.subr.mxu0 0.0
    %v162 = vand.u32 %v44, 4294901760
    %163 = vmatpush2.msra.mxu0 %v162
    %164 = vmatprep.subr.mxu0 0.0
    %v165 = vand.u32 %v43, 4294901760
    %166 = vmatpush2.msra.mxu0 %v165
    %167 = vmatprep.subr.mxu0 0.0
    %v168 = vand.u32 %v42, 4294901760
    %169 = vmatpush2.msra.mxu0 %v168
    %170 = vmatprep.subr.mxu0 0.0
    %v171 = vand.u32 %v41, 4294901760
    %172 = vmatpush2.msra.mxu0 %v171
    %v173 = vand.u32 %v23, 4294901760
    %v174 = vsub.f32 %v23, %v173
    %v175 = vand.u32 %v174, 4294901760
    %v176 = vsub.f32 %v174, %v175
    %v177 = vand.u32 %v176, 4294901760
    %178 = vmatprep.mubr.f32.mxu0 %v177
    %v179 = vand.u32 %v22, 4294901760
    %v180 = vsub.f32 %v22, %v179
    %v181 = vand.u32 %v180, 4294901760
    %v182 = vsub.f32 %v180, %v181
    %v183 = vand.u32 %v182, 4294901760
    %184 = vmatmul.mubr.f32.gmra.mxu0 %v183
    %v185 = vpop.f32.mrf.mxu0
    %v186 = vadd.f32 %v67, %v185
    %v187 = vpop.f32.mrf.mxu0
    %188 = vdwg.mxu0
    %189 = vmatprep.subr.mxu0 0.0
    %v190 = vand.u32 %v40, 4294901760
    %v191 = vsub.f32 %v40, %v190
    %v192 = vand.u32 %v191, 4294901760
    %v193 = vsub.f32 %v191, %v192
    %v194 = vand.u32 %v193, 4294901760
    %195 = vmatpush1.msra.mxu0 %v194
    %196 = vmatprep.subr.mxu0 0.0
    %v197 = vand.u32 %v39, 4294901760
    %v198 = vsub.f32 %v39, %v197
    %v199 = vand.u32 %v198, 4294901760
    %v200 = vsub.f32 %v198, %v199
    %v201 = vand.u32 %v200, 4294901760
    %202 = vmatpush1.msra.mxu0 %v201
    %203 = vmatprep.subr.mxu0 0.0
    %v204 = vand.u32 %v38, 4294901760
    %v205 = vsub.f32 %v38, %v204
    %v206 = vand.u32 %v205, 4294901760
    %v207 = vsub.f32 %v205, %v206
    %v208 = vand.u32 %v207, 4294901760
    %209 = vmatpush1.msra.mxu0 %v208
    %210 = vmatprep.subr.mxu0 0.0
    %v211 = vand.u32 %v37, 4294901760
    %v212 = vsub.f32 %v37, %v211
    %v213 = vand.u32 %v212, 4294901760
    %v214 = vsub.f32 %v212, %v213
    %v215 = vand.u32 %v214, 4294901760
    %216 = vmatpush1.msra.mxu0 %v215
    %217 = vmatprep.subr.mxu0 0.0
    %v218 = vand.u32 %v36, 4294901760
    %v219 = vsub.f32 %v36, %v218
    %v220 = vand.u32 %v219, 4294901760
    %v221 = vsub.f32 %v219, %v220
    %v222 = vand.u32 %v221, 4294901760
    %223 = vmatpush1.msra.mxu0 %v222
    %224 = vmatprep.subr.mxu0 0.0
    %v225 = vand.u32 %v35, 4294901760
    %v226 = vsub.f32 %v35, %v225
    %v227 = vand.u32 %v226, 4294901760
    %v228 = vsub.f32 %v226, %v227
    %v229 = vand.u32 %v228, 4294901760
    %230 = vmatpush1.msra.mxu0 %v229
    %231 = vmatprep.subr.mxu0 0.0
    %v232 = vand.u32 %v34, 4294901760
    %v233 = vsub.f32 %v34, %v232
    %v234 = vand.u32 %v233, 4294901760
    %v235 = vsub.f32 %v233, %v234
    %v236 = vand.u32 %v235, 4294901760
    %237 = vmatpush1.msra.mxu0 %v236
    %238 = vmatprep.subr.mxu0 0.0
    %v239 = vand.u32 %v33, 4294901760
    %v240 = vsub.f32 %v33, %v239
    %v241 = vand.u32 %v240, 4294901760
    %v242 = vsub.f32 %v240, %v241
    %v243 = vand.u32 %v242, 4294901760
    %244 = vmatpush1.msra.mxu0 %v243
    %245 = vmatprep.subr.mxu0 0.0
    %v246 = vand.u32 %v32, 4294901760
    %v247 = vsub.f32 %v32, %v246
    %v248 = vand.u32 %v247, 4294901760
    %v249 = vsub.f32 %v247, %v248
    %v250 = vand.u32 %v249, 4294901760
    %251 = vmatpush1.msra.mxu0 %v250
    %252 = vmatprep.subr.mxu0 0.0
    %v253 = vand.u32 %v31, 4294901760
    %v254 = vsub.f32 %v31, %v253
    %v255 = vand.u32 %v254, 4294901760
    %v256 = vsub.f32 %v254, %v255
    %v257 = vand.u32 %v256, 4294901760
    %258 = vmatpush1.msra.mxu0 %v257
    %259 = vmatprep.subr.mxu0 0.0
    %v260 = vand.u32 %v30, 4294901760
    %v261 = vsub.f32 %v30, %v260
    %v262 = vand.u32 %v261, 4294901760
    %v263 = vsub.f32 %v261, %v262
    %v264 = vand.u32 %v263, 4294901760
    %265 = vmatpush1.msra.mxu0 %v264
    %266 = vmatprep.subr.mxu0 0.0
    %v267 = vand.u32 %v29, 4294901760
    %v268 = vsub.f32 %v29, %v267
    %v269 = vand.u32 %v268, 4294901760
    %v270 = vsub.f32 %v268, %v269
    %v271 = vand.u32 %v270, 4294901760
    %272 = vmatpush1.msra.mxu0 %v271
    %273 = vmatprep.subr.mxu0 0.0
    %v274 = vand.u32 %v28, 4294901760
    %v275 = vsub.f32 %v28, %v274
    %v276 = vand.u32 %v275, 4294901760
    %v277 = vsub.f32 %v275, %v276
    %v278 = vand.u32 %v277, 4294901760
    %279 = vmatpush1.msra.mxu0 %v278
    %280 = vmatprep.subr.mxu0 0.0
    %v281 = vand.u32 %v27, 4294901760
    %v282 = vsub.f32 %v27, %v281
    %v283 = vand.u32 %v282, 4294901760
    %v284 = vsub.f32 %v282, %v283
    %v285 = vand.u32 %v284, 4294901760
    %286 = vmatpush1.msra.mxu0 %v285
    %287 = vmatprep.subr.mxu0 0.0
    %v288 = vand.u32 %v26, 4294901760
    %v289 = vsub.f32 %v26, %v288
    %v290 = vand.u32 %v289, 4294901760
    %v291 = vsub.f32 %v289, %v290
    %v292 = vand.u32 %v291, 4294901760
    %293 = vmatpush1.msra.mxu0 %v292
    %294 = vmatprep.subr.mxu0 0.0
    %v295 = vand.u32 %v25, 4294901760
    %v296 = vsub.f32 %v25, %v295
    %v297 = vand.u32 %v296, 4294901760
    %v298 = vsub.f32 %v296, %v297
    %v299 = vand.u32 %v298, 4294901760
    %300 = vmatpush1.msra.mxu0 %v299
    %301 = vmatprep.subr.mxu0 0.0
    %v302 = vand.u32 %v56, 4294901760
    %v303 = vsub.f32 %v56, %v302
    %v304 = vand.u32 %v303, 4294901760
    %v305 = vsub.f32 %v303, %v304
    %v306 = vand.u32 %v305, 4294901760
    %307 = vmatpush2.msra.mxu0 %v306
    %308 = vmatprep.subr.mxu0 0.0
    %v309 = vand.u32 %v55, 4294901760
    %v310 = vsub.f32 %v55, %v309
    %v311 = vand.u32 %v310, 4294901760
    %v312 = vsub.f32 %v310, %v311
    %v313 = vand.u32 %v312, 4294901760
    %314 = vmatpush2.msra.mxu0 %v313
    %315 = vmatprep.subr.mxu0 0.0
    %v316 = vand.u32 %v54, 4294901760
    %v317 = vsub.f32 %v54, %v316
    %v318 = vand.u32 %v317, 4294901760
    %v319 = vsub.f32 %v317, %v318
    %v320 = vand.u32 %v319, 4294901760
    %321 = vmatpush2.msra.mxu0 %v320
    %322 = vmatprep.subr.mxu0 0.0
    %v323 = vand.u32 %v53, 4294901760
    %v324 = vsub.f32 %v53, %v323
    %v325 = vand.u32 %v324, 4294901760
    %v326 = vsub.f32 %v324, %v325
    %v327 = vand.u32 %v326, 4294901760
    %328 = vmatpush2.msra.mxu0 %v327
    %329 = vmatprep.subr.mxu0 0.0
    %v330 = vand.u32 %v52, 4294901760
    %v331 = vsub.f32 %v52, %v330
    %v332 = vand.u32 %v331, 4294901760
    %v333 = vsub.f32 %v331, %v332
    %v334 = vand.u32 %v333, 4294901760
    %335 = vmatpush2.msra.mxu0 %v334
    %336 = vmatprep.subr.mxu0 0.0
    %v337 = vand.u32 %v51, 4294901760
    %v338 = vsub.f32 %v51, %v337
    %v339 = vand.u32 %v338, 4294901760
    %v340 = vsub.f32 %v338, %v339
    %v341 = vand.u32 %v340, 4294901760
    %342 = vmatpush2.msra.mxu0 %v341
    %343 = vmatprep.subr.mxu0 0.0
    %v344 = vand.u32 %v50, 4294901760
    %v345 = vsub.f32 %v50, %v344
    %v346 = vand.u32 %v345, 4294901760
    %v347 = vsub.f32 %v345, %v346
    %v348 = vand.u32 %v347, 4294901760
    %349 = vmatpush2.msra.mxu0 %v348
    %350 = vmatprep.subr.mxu0 0.0
    %v351 = vand.u32 %v49, 4294901760
    %v352 = vsub.f32 %v49, %v351
    %v353 = vand.u32 %v352, 4294901760
    %v354 = vsub.f32 %v352, %v353
    %v355 = vand.u32 %v354, 4294901760
    %356 = vmatpush2.msra.mxu0 %v355
    %357 = vmatprep.subr.mxu0 0.0
    %v358 = vand.u32 %v48, 4294901760
    %v359 = vsub.f32 %v48, %v358
    %v360 = vand.u32 %v359, 4294901760
    %v361 = vsub.f32 %v359, %v360
    %v362 = vand.u32 %v361, 4294901760
    %363 = vmatpush2.msra.mxu0 %v362
    %364 = vmatprep.subr.mxu0 0.0
    %v365 = vand.u32 %v47, 4294901760
    %v366 = vsub.f32 %v47, %v365
    %v367 = vand.u32 %v366, 4294901760
    %v368 = vsub.f32 %v366, %v367
    %v369 = vand.u32 %v368, 4294901760
    %370 = vmatpush2.msra.mxu0 %v369
    %371 = vmatprep.subr.mxu0 0.0
    %v372 = vand.u32 %v46, 4294901760
    %v373 = vsub.f32 %v46, %v372
    %v374 = vand.u32 %v373, 4294901760
    %v375 = vsub.f32 %v373, %v374
    %v376 = vand.u32 %v375, 4294901760
    %377 = vmatpush2.msra.mxu0 %v376
    %378 = vmatprep.subr.mxu0 0.0
    %v379 = vand.u32 %v45, 4294901760
    %v380 = vsub.f32 %v45, %v379
    %v381 = vand.u32 %v380, 4294901760
    %v382 = vsub.f32 %v380, %v381
    %v383 = vand.u32 %v382, 4294901760
    %384 = vmatpush2.msra.mxu0 %v383
    %385 = vmatprep.subr.mxu0 0.0
    %v386 = vand.u32 %v44, 4294901760
    %v387 = vsub.f32 %v44, %v386
    %v388 = vand.u32 %v387, 4294901760
    %v389 = vsub.f32 %v387, %v388
    %v390 = vand.u32 %v389, 4294901760
    %391 = vmatpush2.msra.mxu0 %v390
    %392 = vmatprep.subr.mxu0 0.0
    %v393 = vand.u32 %v43, 4294901760
    %v394 = vsub.f32 %v43, %v393
    %v395 = vand.u32 %v394, 4294901760
    %v396 = vsub.f32 %v394, %v395
    %v397 = vand.u32 %v396, 4294901760
    %398 = vmatpush2.msra.mxu0 %v397
    %399 = vmatprep.subr.mxu0 0.0
    %v400 = vand.u32 %v42, 4294901760
    %v401 = vsub.f32 %v42, %v400
    %v402 = vand.u32 %v401, 4294901760
    %v403 = vsub.f32 %v401, %v402
    %v404 = vand.u32 %v403, 4294901760
    %405 = vmatpush2.msra.mxu0 %v404
    %406 = vmatprep.subr.mxu0 0.0
    %v407 = vand.u32 %v41, 4294901760
    %v408 = vsub.f32 %v41, %v407
    %v409 = vand.u32 %v408, 4294901760
    %v410 = vsub.f32 %v408, %v409
    %v411 = vand.u32 %v410, 4294901760
    %412 = vmatpush2.msra.mxu0 %v411
    %v413 = vand.u32 %v23, 4294901760
    %414 = vmatprep.mubr.f32.mxu0 %v413
    %v415 = vand.u32 %v22, 4294901760
    %416 = vmatmul.mubr.f32.gmra.mxu0 %v415
    %v417 = vpop.f32.mrf.mxu0
    %v418 = vadd.f32 %v186, %v417
    %v419 = vpop.f32.mrf.mxu0
    %420 = vdwg.mxu0
    %421 = vmatprep.subr.mxu0 0.0
    %v422 = vand.u32 %v40, 4294901760
    %v423 = vsub.f32 %v40, %v422
    %424 = vmatpush1.msra.mxu0 %v423
    %425 = vmatprep.subr.mxu0 0.0
    %v426 = vand.u32 %v39, 4294901760
    %v427 = vsub.f32 %v39, %v426
    %428 = vmatpush1.msra.mxu0 %v427
    %429 = vmatprep.subr.mxu0 0.0
    %v430 = vand.u32 %v38, 4294901760
    %v431 = vsub.f32 %v38, %v430
    %432 = vmatpush1.msra.mxu0 %v431
    %433 = vmatprep.subr.mxu0 0.0
    %v434 = vand.u32 %v37, 4294901760
    %v435 = vsub.f32 %v37, %v434
    %436 = vmatpush1.msra.mxu0 %v435
    %437 = vmatprep.subr.mxu0 0.0
    %v438 = vand.u32 %v36, 4294901760
    %v439 = vsub.f32 %v36, %v438
    %440 = vmatpush1.msra.mxu0 %v439
    %441 = vmatprep.subr.mxu0 0.0
    %v442 = vand.u32 %v35, 4294901760
    %v443 = vsub.f32 %v35, %v442
    %444 = vmatpush1.msra.mxu0 %v443
    %445 = vmatprep.subr.mxu0 0.0
    %v446 = vand.u32 %v34, 4294901760
    %v447 = vsub.f32 %v34, %v446
    %448 = vmatpush1.msra.mxu0 %v447
    %449 = vmatprep.subr.mxu0 0.0
    %v450 = vand.u32 %v33, 4294901760
    %v451 = vsub.f32 %v33, %v450
    %452 = vmatpush1.msra.mxu0 %v451
    %453 = vmatprep.subr.mxu0 0.0
    %v454 = vand.u32 %v32, 4294901760
    %v455 = vsub.f32 %v32, %v454
    %456 = vmatpush1.msra.mxu0 %v455
    %457 = vmatprep.subr.mxu0 0.0
    %v458 = vand.u32 %v31, 4294901760
    %v459 = vsub.f32 %v31, %v458
    %460 = vmatpush1.msra.mxu0 %v459
    %461 = vmatprep.subr.mxu0 0.0
    %v462 = vand.u32 %v30, 4294901760
    %v463 = vsub.f32 %v30, %v462
    %464 = vmatpush1.msra.mxu0 %v463
    %465 = vmatprep.subr.mxu0 0.0
    %v466 = vand.u32 %v29, 4294901760
    %v467 = vsub.f32 %v29, %v466
    %468 = vmatpush1.msra.mxu0 %v467
    %469 = vmatprep.subr.mxu0 0.0
    %v470 = vand.u32 %v28, 4294901760
    %v471 = vsub.f32 %v28, %v470
    %472 = vmatpush1.msra.mxu0 %v471
    %473 = vmatprep.subr.mxu0 0.0
    %v474 = vand.u32 %v27, 4294901760
    %v475 = vsub.f32 %v27, %v474
    %476 = vmatpush1.msra.mxu0 %v475
    %477 = vmatprep.subr.mxu0 0.0
    %v478 = vand.u32 %v26, 4294901760
    %v479 = vsub.f32 %v26, %v478
    %480 = vmatpush1.msra.mxu0 %v479
    %481 = vmatprep.subr.mxu0 0.0
    %v482 = vand.u32 %v25, 4294901760
    %v483 = vsub.f32 %v25, %v482
    %484 = vmatpush1.msra.mxu0 %v483
    %485 = vmatprep.subr.mxu0 0.0
    %v486 = vand.u32 %v56, 4294901760
    %v487 = vsub.f32 %v56, %v486
    %488 = vmatpush2.msra.mxu0 %v487
    %489 = vmatprep.subr.mxu0 0.0
    %v490 = vand.u32 %v55, 4294901760
    %v491 = vsub.f32 %v55, %v490
    %492 = vmatpush2.msra.mxu0 %v491
    %493 = vmatprep.subr.mxu0 0.0
    %v494 = vand.u32 %v54, 4294901760
    %v495 = vsub.f32 %v54, %v494
    %496 = vmatpush2.msra.mxu0 %v495
    %497 = vmatprep.subr.mxu0 0.0
    %v498 = vand.u32 %v53, 4294901760
    %v499 = vsub.f32 %v53, %v498
    %500 = vmatpush2.msra.mxu0 %v499
    %501 = vmatprep.subr.mxu0 0.0
    %v502 = vand.u32 %v52, 4294901760
    %v503 = vsub.f32 %v52, %v502
    %504 = vmatpush2.msra.mxu0 %v503
    %505 = vmatprep.subr.mxu0 0.0
    %v506 = vand.u32 %v51, 4294901760
    %v507 = vsub.f32 %v51, %v506
    %508 = vmatpush2.msra.mxu0 %v507
    %509 = vmatprep.subr.mxu0 0.0
    %v510 = vand.u32 %v50, 4294901760
    %v511 = vsub.f32 %v50, %v510
    %512 = vmatpush2.msra.mxu0 %v511
    %513 = vmatprep.subr.mxu0 0.0
    %v514 = vand.u32 %v49, 4294901760
    %v515 = vsub.f32 %v49, %v514
    %516 = vmatpush2.msra.mxu0 %v515
    %517 = vmatprep.subr.mxu0 0.0
    %v518 = vand.u32 %v48, 4294901760
    %v519 = vsub.f32 %v48, %v518
    %520 = vmatpush2.msra.mxu0 %v519
    %521 = vmatprep.subr.mxu0 0.0
    %v522 = vand.u32 %v47, 4294901760
    %v523 = vsub.f32 %v47, %v522
    %524 = vmatpush2.msra.mxu0 %v523
    %525 = vmatprep.subr.mxu0 0.0
    %v526 = vand.u32 %v46, 4294901760
    %v527 = vsub.f32 %v46, %v526
    %528 = vmatpush2.msra.mxu0 %v527
    %529 = vmatprep.subr.mxu0 0.0
    %v530 = vand.u32 %v45, 4294901760
    %v531 = vsub.f32 %v45, %v530
    %532 = vmatpush2.msra.mxu0 %v531
    %533 = vmatprep.subr.mxu0 0.0
    %v534 = vand.u32 %v44, 4294901760
    %v535 = vsub.f32 %v44, %v534
    %536 = vmatpush2.msra.mxu0 %v535
    %537 = vmatprep.subr.mxu0 0.0
    %v538 = vand.u32 %v43, 4294901760
    %v539 = vsub.f32 %v43, %v538
    %540 = vmatpush2.msra.mxu0 %v539
    %541 = vmatprep.subr.mxu0 0.0
    %v542 = vand.u32 %v42, 4294901760
    %v543 = vsub.f32 %v42, %v542
    %544 = vmatpush2.msra.mxu0 %v543
    %545 = vmatprep.subr.mxu0 0.0
    %v546 = vand.u32 %v41, 4294901760
    %v547 = vsub.f32 %v41, %v546
    %548 = vmatpush2.msra.mxu0 %v547
    %v549 = vand.u32 %v23, 4294901760
    %v550 = vsub.f32 %v23, %v549
    %551 = vmatprep.mubr.f32.mxu0 %v550
    %v552 = vand.u32 %v22, 4294901760
    %v553 = vsub.f32 %v22, %v552
    %554 = vmatmul.mubr.f32.gmra.mxu0 %v553
    %v555 = vpop.f32.mrf.mxu0
    %v556 = vadd.f32 %v418, %v555
    %v557 = vpop.f32.mrf.mxu0
    %558 = vdwg.mxu0
    %559 = vmatprep.subr.mxu0 0.0
    %v560 = vand.u32 %v40, 4294901760
    %561 = vmatpush1.msra.mxu0 %v560
    %562 = vmatprep.subr.mxu0 0.0
    %v563 = vand.u32 %v39, 4294901760
    %564 = vmatpush1.msra.mxu0 %v563
    %565 = vmatprep.subr.mxu0 0.0
    %v566 = vand.u32 %v38, 4294901760
    %567 = vmatpush1.msra.mxu0 %v566
    %568 = vmatprep.subr.mxu0 0.0
    %v569 = vand.u32 %v37, 4294901760
    %570 = vmatpush1.msra.mxu0 %v569
    %571 = vmatprep.subr.mxu0 0.0
    %v572 = vand.u32 %v36, 4294901760
    %573 = vmatpush1.msra.mxu0 %v572
    %574 = vmatprep.subr.mxu0 0.0
    %v575 = vand.u32 %v35, 4294901760
    %576 = vmatpush1.msra.mxu0 %v575
    %577 = vmatprep.subr.mxu0 0.0
    %v578 = vand.u32 %v34, 4294901760
    %579 = vmatpush1.msra.mxu0 %v578
    %580 = vmatprep.subr.mxu0 0.0
    %v581 = vand.u32 %v33, 4294901760
    %582 = vmatpush1.msra.mxu0 %v581
    %583 = vmatprep.subr.mxu0 0.0
    %v584 = vand.u32 %v32, 4294901760
    %585 = vmatpush1.msra.mxu0 %v584
    %586 = vmatprep.subr.mxu0 0.0
    %v587 = vand.u32 %v31, 4294901760
    %588 = vmatpush1.msra.mxu0 %v587
    %589 = vmatprep.subr.mxu0 0.0
    %v590 = vand.u32 %v30, 4294901760
    %591 = vmatpush1.msra.mxu0 %v590
    %592 = vmatprep.subr.mxu0 0.0
    %v593 = vand.u32 %v29, 4294901760
    %594 = vmatpush1.msra.mxu0 %v593
    %595 = vmatprep.subr.mxu0 0.0
    %v596 = vand.u32 %v28, 4294901760
    %597 = vmatpush1.msra.mxu0 %v596
    %598 = vmatprep.subr.mxu0 0.0
    %v599 = vand.u32 %v27, 4294901760
    %600 = vmatpush1.msra.mxu0 %v599
    %601 = vmatprep.subr.mxu0 0.0
    %v602 = vand.u32 %v26, 4294901760
    %603 = vmatpush1.msra.mxu0 %v602
    %604 = vmatprep.subr.mxu0 0.0
    %v605 = vand.u32 %v25, 4294901760
    %606 = vmatpush1.msra.mxu0 %v605
    %607 = vmatprep.subr.mxu0 0.0
    %v608 = vand.u32 %v56, 4294901760
    %609 = vmatpush2.msra.mxu0 %v608
    %610 = vmatprep.subr.mxu0 0.0
    %v611 = vand.u32 %v55, 4294901760
    %612 = vmatpush2.msra.mxu0 %v611
    %613 = vmatprep.subr.mxu0 0.0
    %v614 = vand.u32 %v54, 4294901760
    %615 = vmatpush2.msra.mxu0 %v614
    %616 = vmatprep.subr.mxu0 0.0
    %v617 = vand.u32 %v53, 4294901760
    %618 = vmatpush2.msra.mxu0 %v617
    %619 = vmatprep.subr.mxu0 0.0
    %v620 = vand.u32 %v52, 4294901760
    %621 = vmatpush2.msra.mxu0 %v620
    %622 = vmatprep.subr.mxu0 0.0
    %v623 = vand.u32 %v51, 4294901760
    %624 = vmatpush2.msra.mxu0 %v623
    %625 = vmatprep.subr.mxu0 0.0
    %v626 = vand.u32 %v50, 4294901760
    %627 = vmatpush2.msra.mxu0 %v626
    %628 = vmatprep.subr.mxu0 0.0
    %v629 = vand.u32 %v49, 4294901760
    %630 = vmatpush2.msra.mxu0 %v629
    %631 = vmatprep.subr.mxu0 0.0
    %v632 = vand.u32 %v48, 4294901760
    %633 = vmatpush2.msra.mxu0 %v632
    %634 = vmatprep.subr.mxu0 0.0
    %v635 = vand.u32 %v47, 4294901760
    %636 = vmatpush2.msra.mxu0 %v635
    %637 = vmatprep.subr.mxu0 0.0
    %v638 = vand.u32 %v46, 4294901760
    %639 = vmatpush2.msra.mxu0 %v638
    %640 = vmatprep.subr.mxu0 0.0
    %v641 = vand.u32 %v45, 4294901760
    %642 = vmatpush2.msra.mxu0 %v641
    %643 = vmatprep.subr.mxu0 0.0
    %v644 = vand.u32 %v44, 4294901760
    %645 = vmatpush2.msra.mxu0 %v644
    %646 = vmatprep.subr.mxu0 0.0
    %v647 = vand.u32 %v43, 4294901760
    %648 = vmatpush2.msra.mxu0 %v647
    %649 = vmatprep.subr.mxu0 0.0
    %v650 = vand.u32 %v42, 4294901760
    %651 = vmatpush2.msra.mxu0 %v650
    %652 = vmatprep.subr.mxu0 0.0
    %v653 = vand.u32 %v41, 4294901760
    %654 = vmatpush2.msra.mxu0 %v653
    %v655 = vand.u32 %v23, 4294901760
    %v656 = vsub.f32 %v23, %v655
    %v657 = vand.u32 %v656, 4294901760
    %658 = vmatprep.mubr.f32.mxu0 %v657
    %v659 = vand.u32 %v22, 4294901760
    %v660 = vsub.f32 %v22, %v659
    %v661 = vand.u32 %v660, 4294901760
    %662 = vmatmul.mubr.f32.gmra.mxu0 %v661
    %v663 = vpop.f32.mrf.mxu0
    %v664 = vadd.f32 %v556, %v663
    %v665 = vpop.f32.mrf.mxu0
    %666 = vdwg.mxu0
    %667 = vmatprep.subr.mxu0 0.0
    %v668 = vand.u32 %v40, 4294901760
    %v669 = vsub.f32 %v40, %v668
    %v670 = vand.u32 %v669, 4294901760
    %671 = vmatpush1.msra.mxu0 %v670
    %672 = vmatprep.subr.mxu0 0.0
    %v673 = vand.u32 %v39, 4294901760
    %v674 = vsub.f32 %v39, %v673
    %v675 = vand.u32 %v674, 4294901760
    %676 = vmatpush1.msra.mxu0 %v675
    %677 = vmatprep.subr.mxu0 0.0
    %v678 = vand.u32 %v38, 4294901760
    %v679 = vsub.f32 %v38, %v678
    %v680 = vand.u32 %v679, 4294901760
    %681 = vmatpush1.msra.mxu0 %v680
    %682 = vmatprep.subr.mxu0 0.0
    %v683 = vand.u32 %v37, 4294901760
    %v684 = vsub.f32 %v37, %v683
    %v685 = vand.u32 %v684, 4294901760
    %686 = vmatpush1.msra.mxu0 %v685
    %687 = vmatprep.subr.mxu0 0.0
    %v688 = vand.u32 %v36, 4294901760
    %v689 = vsub.f32 %v36, %v688
    %v690 = vand.u32 %v689, 4294901760
    %691 = vmatpush1.msra.mxu0 %v690
    %692 = vmatprep.subr.mxu0 0.0
    %v693 = vand.u32 %v35, 4294901760
    %v694 = vsub.f32 %v35, %v693
    %v695 = vand.u32 %v694, 4294901760
    %696 = vmatpush1.msra.mxu0 %v695
    %697 = vmatprep.subr.mxu0 0.0
    %v698 = vand.u32 %v34, 4294901760
    %v699 = vsub.f32 %v34, %v698
    %v700 = vand.u32 %v699, 4294901760
    %701 = vmatpush1.msra.mxu0 %v700
    %702 = vmatprep.subr.mxu0 0.0
    %v703 = vand.u32 %v33, 4294901760
    %v704 = vsub.f32 %v33, %v703
    %v705 = vand.u32 %v704, 4294901760
    %706 = vmatpush1.msra.mxu0 %v705
    %707 = vmatprep.subr.mxu0 0.0
    %v708 = vand.u32 %v32, 4294901760
    %v709 = vsub.f32 %v32, %v708
    %v710 = vand.u32 %v709, 4294901760
    %711 = vmatpush1.msra.mxu0 %v710
    %712 = vmatprep.subr.mxu0 0.0
    %v713 = vand.u32 %v31, 4294901760
    %v714 = vsub.f32 %v31, %v713
    %v715 = vand.u32 %v714, 4294901760
    %716 = vmatpush1.msra.mxu0 %v715
    %717 = vmatprep.subr.mxu0 0.0
    %v718 = vand.u32 %v30, 4294901760
    %v719 = vsub.f32 %v30, %v718
    %v720 = vand.u32 %v719, 4294901760
    %721 = vmatpush1.msra.mxu0 %v720
    %722 = vmatprep.subr.mxu0 0.0
    %v723 = vand.u32 %v29, 4294901760
    %v724 = vsub.f32 %v29, %v723
    %v725 = vand.u32 %v724, 4294901760
    %726 = vmatpush1.msra.mxu0 %v725
    %727 = vmatprep.subr.mxu0 0.0
    %v728 = vand.u32 %v28, 4294901760
    %v729 = vsub.f32 %v28, %v728
    %v730 = vand.u32 %v729, 4294901760
    %731 = vmatpush1.msra.mxu0 %v730
    %732 = vmatprep.subr.mxu0 0.0
    %v733 = vand.u32 %v27, 4294901760
    %v734 = vsub.f32 %v27, %v733
    %v735 = vand.u32 %v734, 4294901760
    %736 = vmatpush1.msra.mxu0 %v735
    %737 = vmatprep.subr.mxu0 0.0
    %v738 = vand.u32 %v26, 4294901760
    %v739 = vsub.f32 %v26, %v738
    %v740 = vand.u32 %v739, 4294901760
    %741 = vmatpush1.msra.mxu0 %v740
    %742 = vmatprep.subr.mxu0 0.0
    %v743 = vand.u32 %v25, 4294901760
    %v744 = vsub.f32 %v25, %v743
    %v745 = vand.u32 %v744, 4294901760
    %746 = vmatpush1.msra.mxu0 %v745
    %747 = vmatprep.subr.mxu0 0.0
    %v748 = vand.u32 %v56, 4294901760
    %v749 = vsub.f32 %v56, %v748
    %v750 = vand.u32 %v749, 4294901760
    %751 = vmatpush2.msra.mxu0 %v750
    %752 = vmatprep.subr.mxu0 0.0
    %v753 = vand.u32 %v55, 4294901760
    %v754 = vsub.f32 %v55, %v753
    %v755 = vand.u32 %v754, 4294901760
    %756 = vmatpush2.msra.mxu0 %v755
    %757 = vmatprep.subr.mxu0 0.0
    %v758 = vand.u32 %v54, 4294901760
    %v759 = vsub.f32 %v54, %v758
    %v760 = vand.u32 %v759, 4294901760
    %761 = vmatpush2.msra.mxu0 %v760
    %762 = vmatprep.subr.mxu0 0.0
    %v763 = vand.u32 %v53, 4294901760
    %v764 = vsub.f32 %v53, %v763
    %v765 = vand.u32 %v764, 4294901760
    %766 = vmatpush2.msra.mxu0 %v765
    %767 = vmatprep.subr.mxu0 0.0
    %v768 = vand.u32 %v52, 4294901760
    %v769 = vsub.f32 %v52, %v768
    %v770 = vand.u32 %v769, 4294901760
    %771 = vmatpush2.msra.mxu0 %v770
    %772 = vmatprep.subr.mxu0 0.0
    %v773 = vand.u32 %v51, 4294901760
    %v774 = vsub.f32 %v51, %v773
    %v775 = vand.u32 %v774, 4294901760
    %776 = vmatpush2.msra.mxu0 %v775
    %777 = vmatprep.subr.mxu0 0.0
    %v778 = vand.u32 %v50, 4294901760
    %v779 = vsub.f32 %v50, %v778
    %v780 = vand.u32 %v779, 4294901760
    %781 = vmatpush2.msra.mxu0 %v780
    %782 = vmatprep.subr.mxu0 0.0
    %v783 = vand.u32 %v49, 4294901760
    %v784 = vsub.f32 %v49, %v783
    %v785 = vand.u32 %v784, 4294901760
    %786 = vmatpush2.msra.mxu0 %v785
    %787 = vmatprep.subr.mxu0 0.0
    %v788 = vand.u32 %v48, 4294901760
    %v789 = vsub.f32 %v48, %v788
    %v790 = vand.u32 %v789, 4294901760
    %791 = vmatpush2.msra.mxu0 %v790
    %792 = vmatprep.subr.mxu0 0.0
    %v793 = vand.u32 %v47, 4294901760
    %v794 = vsub.f32 %v47, %v793
    %v795 = vand.u32 %v794, 4294901760
    %796 = vmatpush2.msra.mxu0 %v795
    %797 = vmatprep.subr.mxu0 0.0
    %v798 = vand.u32 %v46, 4294901760
    %v799 = vsub.f32 %v46, %v798
    %v800 = vand.u32 %v799, 4294901760
    %801 = vmatpush2.msra.mxu0 %v800
    %802 = vmatprep.subr.mxu0 0.0
    %v803 = vand.u32 %v45, 4294901760
    %v804 = vsub.f32 %v45, %v803
    %v805 = vand.u32 %v804, 4294901760
    %806 = vmatpush2.msra.mxu0 %v805
    %807 = vmatprep.subr.mxu0 0.0
    %v808 = vand.u32 %v44, 4294901760
    %v809 = vsub.f32 %v44, %v808
    %v810 = vand.u32 %v809, 4294901760
    %811 = vmatpush2.msra.mxu0 %v810
    %812 = vmatprep.subr.mxu0 0.0
    %v813 = vand.u32 %v43, 4294901760
    %v814 = vsub.f32 %v43, %v813
    %v815 = vand.u32 %v814, 4294901760
    %816 = vmatpush2.msra.mxu0 %v815
    %817 = vmatprep.subr.mxu0 0.0
    %v818 = vand.u32 %v42, 4294901760
    %v819 = vsub.f32 %v42, %v818
    %v820 = vand.u32 %v819, 4294901760
    %821 = vmatpush2.msra.mxu0 %v820
    %822 = vmatprep.subr.mxu0 0.0
    %v823 = vand.u32 %v41, 4294901760
    %v824 = vsub.f32 %v41, %v823
    %v825 = vand.u32 %v824, 4294901760
    %826 = vmatpush2.msra.mxu0 %v825
    %v827 = vand.u32 %v23, 4294901760
    %828 = vmatprep.mubr.f32.mxu0 %v827
    %v829 = vand.u32 %v22, 4294901760
    %830 = vmatmul.mubr.f32.gmra.mxu0 %v829
    %v831 = vpop.f32.mrf.mxu0
    %v832 = vadd.f32 %v664, %v831
    %v833 = vpop.f32.mrf.mxu0
    %834 = vdwg.mxu0
    %835 = vmatprep.subr.mxu0 0.0
    %v836 = vand.u32 %v40, 4294901760
    %837 = vmatpush1.msra.mxu0 %v836
    %838 = vmatprep.subr.mxu0 0.0
    %v839 = vand.u32 %v39, 4294901760
    %840 = vmatpush1.msra.mxu0 %v839
    %841 = vmatprep.subr.mxu0 0.0
    %v842 = vand.u32 %v38, 4294901760
    %843 = vmatpush1.msra.mxu0 %v842
    %844 = vmatprep.subr.mxu0 0.0
    %v845 = vand.u32 %v37, 4294901760
    %846 = vmatpush1.msra.mxu0 %v845
    %847 = vmatprep.subr.mxu0 0.0
    %v848 = vand.u32 %v36, 4294901760
    %849 = vmatpush1.msra.mxu0 %v848
    %850 = vmatprep.subr.mxu0 0.0
    %v851 = vand.u32 %v35, 4294901760
    %852 = vmatpush1.msra.mxu0 %v851
    %853 = vmatprep.subr.mxu0 0.0
    %v854 = vand.u32 %v34, 4294901760
    %855 = vmatpush1.msra.mxu0 %v854
    %856 = vmatprep.subr.mxu0 0.0
    %v857 = vand.u32 %v33, 4294901760
    %858 = vmatpush1.msra.mxu0 %v857
    %859 = vmatprep.subr.mxu0 0.0
    %v860 = vand.u32 %v32, 4294901760
    %861 = vmatpush1.msra.mxu0 %v860
    %862 = vmatprep.subr.mxu0 0.0
    %v863 = vand.u32 %v31, 4294901760
    %864 = vmatpush1.msra.mxu0 %v863
    %865 = vmatprep.subr.mxu0 0.0
    %v866 = vand.u32 %v30, 4294901760
    %867 = vmatpush1.msra.mxu0 %v866
    %868 = vmatprep.subr.mxu0 0.0
    %v869 = vand.u32 %v29, 4294901760
    %870 = vmatpush1.msra.mxu0 %v869
    %871 = vmatprep.subr.mxu0 0.0
    %v872 = vand.u32 %v28, 4294901760
    %873 = vmatpush1.msra.mxu0 %v872
    %874 = vmatprep.subr.mxu0 0.0
    %v875 = vand.u32 %v27, 4294901760
    %876 = vmatpush1.msra.mxu0 %v875
    %877 = vmatprep.subr.mxu0 0.0
    %v878 = vand.u32 %v26, 4294901760
    %879 = vmatpush1.msra.mxu0 %v878
    %880 = vmatprep.subr.mxu0 0.0
    %v881 = vand.u32 %v25, 4294901760
    %882 = vmatpush1.msra.mxu0 %v881
    %883 = vmatprep.subr.mxu0 0.0
    %v884 = vand.u32 %v56, 4294901760
    %885 = vmatpush2.msra.mxu0 %v884
    %886 = vmatprep.subr.mxu0 0.0
    %v887 = vand.u32 %v55, 4294901760
    %888 = vmatpush2.msra.mxu0 %v887
    %889 = vmatprep.subr.mxu0 0.0
    %v890 = vand.u32 %v54, 4294901760
    %891 = vmatpush2.msra.mxu0 %v890
    %892 = vmatprep.subr.mxu0 0.0
    %v893 = vand.u32 %v53, 4294901760
    %894 = vmatpush2.msra.mxu0 %v893
    %895 = vmatprep.subr.mxu0 0.0
    %v896 = vand.u32 %v52, 4294901760
    %897 = vmatpush2.msra.mxu0 %v896
    %898 = vmatprep.subr.mxu0 0.0
    %v899 = vand.u32 %v51, 4294901760
    %900 = vmatpush2.msra.mxu0 %v899
    %901 = vmatprep.subr.mxu0 0.0
    %v902 = vand.u32 %v50, 4294901760
    %903 = vmatpush2.msra.mxu0 %v902
    %904 = vmatprep.subr.mxu0 0.0
    %v905 = vand.u32 %v49, 4294901760
    %906 = vmatpush2.msra.mxu0 %v905
    %907 = vmatprep.subr.mxu0 0.0
    %v908 = vand.u32 %v48, 4294901760
    %909 = vmatpush2.msra.mxu0 %v908
    %910 = vmatprep.subr.mxu0 0.0
    %v911 = vand.u32 %v47, 4294901760
    %912 = vmatpush2.msra.mxu0 %v911
    %913 = vmatprep.subr.mxu0 0.0
    %v914 = vand.u32 %v46, 4294901760
    %915 = vmatpush2.msra.mxu0 %v914
    %916 = vmatprep.subr.mxu0 0.0
    %v917 = vand.u32 %v45, 4294901760
    %918 = vmatpush2.msra.mxu0 %v917
    %919 = vmatprep.subr.mxu0 0.0
    %v920 = vand.u32 %v44, 4294901760
    %921 = vmatpush2.msra.mxu0 %v920
    %922 = vmatprep.subr.mxu0 0.0
    %v923 = vand.u32 %v43, 4294901760
    %924 = vmatpush2.msra.mxu0 %v923
    %925 = vmatprep.subr.mxu0 0.0
    %v926 = vand.u32 %v42, 4294901760
    %927 = vmatpush2.msra.mxu0 %v926
    %928 = vmatprep.subr.mxu0 0.0
    %v929 = vand.u32 %v41, 4294901760
    %930 = vmatpush2.msra.mxu0 %v929
    %v931 = vand.u32 %v23, 4294901760
    %932 = vmatprep.mubr.f32.mxu0 %v931
    %v933 = vand.u32 %v22, 4294901760
    %934 = vmatmul.mubr.f32.gmra.mxu0 %v933
    %v935 = vpop.f32.mrf.mxu0
    %v936 = vadd.f32 %v832, %v935
    %v937 = vpop.f32.mrf.mxu0
    %938 = vdwg.mxu0
    %939 = vmatprep.subr.mxu0 0.0
    %940 = vmatpush1.msra.mxu0 0.0
    %941 = vmatprep.subr.mxu0 0.0
    %942 = vmatpush1.msra.mxu0 0.0
    %943 = vmatprep.subr.mxu0 0.0
    %944 = vmatpush1.msra.mxu0 0.0
    %945 = vmatprep.subr.mxu0 0.0
    %946 = vmatpush1.msra.mxu0 0.0
    %947 = vmatprep.subr.mxu0 0.0
    %948 = vmatpush1.msra.mxu0 0.0
    %949 = vmatprep.subr.mxu0 0.0
    %950 = vmatpush1.msra.mxu0 0.0
    %951 = vmatprep.subr.mxu0 0.0
    %952 = vmatpush1.msra.mxu0 0.0
    %953 = vmatprep.subr.mxu0 0.0
    %954 = vmatpush1.msra.mxu0 0.0
    %955 = vmatprep.subr.mxu0 0.0
    %956 = vmatpush1.msra.mxu0 0.0
    %957 = vmatprep.subr.mxu0 0.0
    %958 = vmatpush1.msra.mxu0 0.0
    %959 = vmatprep.subr.mxu0 0.0
    %960 = vmatpush1.msra.mxu0 0.0
    %961 = vmatprep.subr.mxu0 0.0
    %v962 = vand.u32 %v75, 4294901760
    %963 = vmatpush1.msra.mxu0 %v962
    %964 = vmatprep.subr.mxu0 0.0
    %v965 = vand.u32 %v60, 4294901760
    %966 = vmatpush1.msra.mxu0 %v965
    %967 = vmatprep.subr.mxu0 0.0
    %v968 = vand.u32 %v59, 4294901760
    %969 = vmatpush1.msra.mxu0 %v968
    %970 = vmatprep.subr.mxu0 0.0
    %v971 = vand.u32 %v58, 4294901760
    %972 = vmatpush1.msra.mxu0 %v971
    %973 = vmatprep.subr.mxu0 0.0
    %v974 = vand.u32 %v57, 4294901760
    %975 = vmatpush1.msra.mxu0 %v974
    %976 = vmatprep.subr.mxu0 0.0
    %977 = vmatpush2.msra.mxu0 0.0
    %978 = vmatprep.subr.mxu0 0.0
    %979 = vmatpush2.msra.mxu0 0.0
    %980 = vmatprep.subr.mxu0 0.0
    %981 = vmatpush2.msra.mxu0 0.0
    %982 = vmatprep.subr.mxu0 0.0
    %983 = vmatpush2.msra.mxu0 0.0
    %984 = vmatprep.subr.mxu0 0.0
    %985 = vmatpush2.msra.mxu0 0.0
    %986 = vmatprep.subr.mxu0 0.0
    %987 = vmatpush2.msra.mxu0 0.0
    %988 = vmatprep.subr.mxu0 0.0
    %989 = vmatpush2.msra.mxu0 0.0
    %990 = vmatprep.subr.mxu0 0.0
    %991 = vmatpush2.msra.mxu0 0.0
    %992 = vmatprep.subr.mxu0 0.0
    %993 = vmatpush2.msra.mxu0 0.0
    %994 = vmatprep.subr.mxu0 0.0
    %995 = vmatpush2.msra.mxu0 0.0
    %996 = vmatprep.subr.mxu0 0.0
    %997 = vmatpush2.msra.mxu0 0.0
    %998 = vmatprep.subr.mxu0 0.0
    %999 = vmatpush2.msra.mxu0 0.0
    %1000 = vmatprep.subr.mxu0 0.0
    %1001 = vmatpush2.msra.mxu0 0.0
    %1002 = vmatprep.subr.mxu0 0.0
    %1003 = vmatpush2.msra.mxu0 0.0
    %1004 = vmatprep.subr.mxu0 0.0
    %1005 = vmatpush2.msra.mxu0 0.0
    %1006 = vmatprep.subr.mxu0 0.0
    %1007 = vmatpush2.msra.mxu0 0.0
    %1008 = vmatprep.mubr.f32.mxu0 0.0
    %v1009 = vand.u32 %v71, 4294901760
    %v1010 = vsub.f32 %v71, %v1009
    %v1011 = vand.u32 %v1010, 4294901760
    %v1012 = vsub.f32 %v1010, %v1011
    %v1013 = vand.u32 %v1012, 4294901760
    %1014 = vmatmul.mubr.f32.gmra.mxu0 %v1013
    %v1015 = vpop.f32.mrf.mxu0
    %v1016 = vadd.f32 %v936, %v1015
    %v1017 = vpop.f32.mrf.mxu0
    %1018 = vdwg.mxu0
    %1019 = vmatprep.subr.mxu0 0.0
    %1020 = vmatpush1.msra.mxu0 0.0
    %1021 = vmatprep.subr.mxu0 0.0
    %1022 = vmatpush1.msra.mxu0 0.0
    %1023 = vmatprep.subr.mxu0 0.0
    %1024 = vmatpush1.msra.mxu0 0.0
    %1025 = vmatprep.subr.mxu0 0.0
    %1026 = vmatpush1.msra.mxu0 0.0
    %1027 = vmatprep.subr.mxu0 0.0
    %1028 = vmatpush1.msra.mxu0 0.0
    %1029 = vmatprep.subr.mxu0 0.0
    %1030 = vmatpush1.msra.mxu0 0.0
    %1031 = vmatprep.subr.mxu0 0.0
    %1032 = vmatpush1.msra.mxu0 0.0
    %1033 = vmatprep.subr.mxu0 0.0
    %1034 = vmatpush1.msra.mxu0 0.0
    %1035 = vmatprep.subr.mxu0 0.0
    %1036 = vmatpush1.msra.mxu0 0.0
    %1037 = vmatprep.subr.mxu0 0.0
    %1038 = vmatpush1.msra.mxu0 0.0
    %1039 = vmatprep.subr.mxu0 0.0
    %1040 = vmatpush1.msra.mxu0 0.0
    %1041 = vmatprep.subr.mxu0 0.0
    %v1042 = vand.u32 %v75, 4294901760
    %v1043 = vsub.f32 %v75, %v1042
    %v1044 = vand.u32 %v1043, 4294901760
    %v1045 = vsub.f32 %v1043, %v1044
    %v1046 = vand.u32 %v1045, 4294901760
    %1047 = vmatpush1.msra.mxu0 %v1046
    %1048 = vmatprep.subr.mxu0 0.0
    %v1049 = vand.u32 %v60, 4294901760
    %v1050 = vsub.f32 %v60, %v1049
    %v1051 = vand.u32 %v1050, 4294901760
    %v1052 = vsub.f32 %v1050, %v1051
    %v1053 = vand.u32 %v1052, 4294901760
    %1054 = vmatpush1.msra.mxu0 %v1053
    %1055 = vmatprep.subr.mxu0 0.0
    %v1056 = vand.u32 %v59, 4294901760
    %v1057 = vsub.f32 %v59, %v1056
    %v1058 = vand.u32 %v1057, 4294901760
    %v1059 = vsub.f32 %v1057, %v1058
    %v1060 = vand.u32 %v1059, 4294901760
    %1061 = vmatpush1.msra.mxu0 %v1060
    %1062 = vmatprep.subr.mxu0 0.0
    %v1063 = vand.u32 %v58, 4294901760
    %v1064 = vsub.f32 %v58, %v1063
    %v1065 = vand.u32 %v1064, 4294901760
    %v1066 = vsub.f32 %v1064, %v1065
    %v1067 = vand.u32 %v1066, 4294901760
    %1068 = vmatpush1.msra.mxu0 %v1067
    %1069 = vmatprep.subr.mxu0 0.0
    %v1070 = vand.u32 %v57, 4294901760
    %v1071 = vsub.f32 %v57, %v1070
    %v1072 = vand.u32 %v1071, 4294901760
    %v1073 = vsub.f32 %v1071, %v1072
    %v1074 = vand.u32 %v1073, 4294901760
    %1075 = vmatpush1.msra.mxu0 %v1074
    %1076 = vmatprep.subr.mxu0 0.0
    %1077 = vmatpush2.msra.mxu0 0.0
    %1078 = vmatprep.subr.mxu0 0.0
    %1079 = vmatpush2.msra.mxu0 0.0
    %1080 = vmatprep.subr.mxu0 0.0
    %1081 = vmatpush2.msra.mxu0 0.0
    %1082 = vmatprep.subr.mxu0 0.0
    %1083 = vmatpush2.msra.mxu0 0.0
    %1084 = vmatprep.subr.mxu0 0.0
    %1085 = vmatpush2.msra.mxu0 0.0
    %1086 = vmatprep.subr.mxu0 0.0
    %1087 = vmatpush2.msra.mxu0 0.0
    %1088 = vmatprep.subr.mxu0 0.0
    %1089 = vmatpush2.msra.mxu0 0.0
    %1090 = vmatprep.subr.mxu0 0.0
    %1091 = vmatpush2.msra.mxu0 0.0
    %1092 = vmatprep.subr.mxu0 0.0
    %1093 = vmatpush2.msra.mxu0 0.0
    %1094 = vmatprep.subr.mxu0 0.0
    %1095 = vmatpush2.msra.mxu0 0.0
    %1096 = vmatprep.subr.mxu0 0.0
    %1097 = vmatpush2.msra.mxu0 0.0
    %1098 = vmatprep.subr.mxu0 0.0
    %1099 = vmatpush2.msra.mxu0 0.0
    %1100 = vmatprep.subr.mxu0 0.0
    %1101 = vmatpush2.msra.mxu0 0.0
    %1102 = vmatprep.subr.mxu0 0.0
    %1103 = vmatpush2.msra.mxu0 0.0
    %1104 = vmatprep.subr.mxu0 0.0
    %1105 = vmatpush2.msra.mxu0 0.0
    %1106 = vmatprep.subr.mxu0 0.0
    %1107 = vmatpush2.msra.mxu0 0.0
    %1108 = vmatprep.mubr.f32.mxu0 0.0
    %v1109 = vand.u32 %v71, 4294901760
    %1110 = vmatmul.mubr.f32.gmra.mxu0 %v1109
    %v1111 = vpop.f32.mrf.mxu0
    %v1112 = vadd.f32 %v1016, %v1111
    %v1113 = vpop.f32.mrf.mxu0
    %1114 = vdwg.mxu0
    %1115 = vmatprep.subr.mxu0 0.0
    %1116 = vmatpush1.msra.mxu0 0.0
    %1117 = vmatprep.subr.mxu0 0.0
    %1118 = vmatpush1.msra.mxu0 0.0
    %1119 = vmatprep.subr.mxu0 0.0
    %1120 = vmatpush1.msra.mxu0 0.0
    %1121 = vmatprep.subr.mxu0 0.0
    %1122 = vmatpush1.msra.mxu0 0.0
    %1123 = vmatprep.subr.mxu0 0.0
    %1124 = vmatpush1.msra.mxu0 0.0
    %1125 = vmatprep.subr.mxu0 0.0
    %1126 = vmatpush1.msra.mxu0 0.0
    %1127 = vmatprep.subr.mxu0 0.0
    %1128 = vmatpush1.msra.mxu0 0.0
    %1129 = vmatprep.subr.mxu0 0.0
    %1130 = vmatpush1.msra.mxu0 0.0
    %1131 = vmatprep.subr.mxu0 0.0
    %1132 = vmatpush1.msra.mxu0 0.0
    %1133 = vmatprep.subr.mxu0 0.0
    %1134 = vmatpush1.msra.mxu0 0.0
    %1135 = vmatprep.subr.mxu0 0.0
    %1136 = vmatpush1.msra.mxu0 0.0
    %1137 = vmatprep.subr.mxu0 0.0
    %v1138 = vand.u32 %v75, 4294901760
    %v1139 = vsub.f32 %v75, %v1138
    %1140 = vmatpush1.msra.mxu0 %v1139
    %1141 = vmatprep.subr.mxu0 0.0
    %v1142 = vand.u32 %v60, 4294901760
    %v1143 = vsub.f32 %v60, %v1142
    %1144 = vmatpush1.msra.mxu0 %v1143
    %1145 = vmatprep.subr.mxu0 0.0
    %v1146 = vand.u32 %v59, 4294901760
    %v1147 = vsub.f32 %v59, %v1146
    %1148 = vmatpush1.msra.mxu0 %v1147
    %1149 = vmatprep.subr.mxu0 0.0
    %v1150 = vand.u32 %v58, 4294901760
    %v1151 = vsub.f32 %v58, %v1150
    %1152 = vmatpush1.msra.mxu0 %v1151
    %1153 = vmatprep.subr.mxu0 0.0
    %v1154 = vand.u32 %v57, 4294901760
    %v1155 = vsub.f32 %v57, %v1154
    %1156 = vmatpush1.msra.mxu0 %v1155
    %1157 = vmatprep.subr.mxu0 0.0
    %1158 = vmatpush2.msra.mxu0 0.0
    %1159 = vmatprep.subr.mxu0 0.0
    %1160 = vmatpush2.msra.mxu0 0.0
    %1161 = vmatprep.subr.mxu0 0.0
    %1162 = vmatpush2.msra.mxu0 0.0
    %1163 = vmatprep.subr.mxu0 0.0
    %1164 = vmatpush2.msra.mxu0 0.0
    %1165 = vmatprep.subr.mxu0 0.0
    %1166 = vmatpush2.msra.mxu0 0.0
    %1167 = vmatprep.subr.mxu0 0.0
    %1168 = vmatpush2.msra.mxu0 0.0
    %1169 = vmatprep.subr.mxu0 0.0
    %1170 = vmatpush2.msra.mxu0 0.0
    %1171 = vmatprep.subr.mxu0 0.0
    %1172 = vmatpush2.msra.mxu0 0.0
    %1173 = vmatprep.subr.mxu0 0.0
    %1174 = vmatpush2.msra.mxu0 0.0
    %1175 = vmatprep.subr.mxu0 0.0
    %1176 = vmatpush2.msra.mxu0 0.0
    %1177 = vmatprep.subr.mxu0 0.0
    %1178 = vmatpush2.msra.mxu0 0.0
    %1179 = vmatprep.subr.mxu0 0.0
    %1180 = vmatpush2.msra.mxu0 0.0
    %1181 = vmatprep.subr.mxu0 0.0
    %1182 = vmatpush2.msra.mxu0 0.0
    %1183 = vmatprep.subr.mxu0 0.0
    %1184 = vmatpush2.msra.mxu0 0.0
    %1185 = vmatprep.subr.mxu0 0.0
    %1186 = vmatpush2.msra.mxu0 0.0
    %1187 = vmatprep.subr.mxu0 0.0
    %1188 = vmatpush2.msra.mxu0 0.0
    %1189 = vmatprep.mubr.f32.mxu0 0.0
    %v1190 = vand.u32 %v71, 4294901760
    %v1191 = vsub.f32 %v71, %v1190
    %1192 = vmatmul.mubr.f32.gmra.mxu0 %v1191
    %v1193 = vpop.f32.mrf.mxu0
    %v1194 = vadd.f32 %v1112, %v1193
    %v1195 = vpop.f32.mrf.mxu0
    %1196 = vdwg.mxu0
    %1197 = vmatprep.subr.mxu0 0.0
    %1198 = vmatpush1.msra.mxu0 0.0
    %1199 = vmatprep.subr.mxu0 0.0
    %1200 = vmatpush1.msra.mxu0 0.0
    %1201 = vmatprep.subr.mxu0 0.0
    %1202 = vmatpush1.msra.mxu0 0.0
    %1203 = vmatprep.subr.mxu0 0.0
    %1204 = vmatpush1.msra.mxu0 0.0
    %1205 = vmatprep.subr.mxu0 0.0
    %1206 = vmatpush1.msra.mxu0 0.0
    %1207 = vmatprep.subr.mxu0 0.0
    %1208 = vmatpush1.msra.mxu0 0.0
    %1209 = vmatprep.subr.mxu0 0.0
    %1210 = vmatpush1.msra.mxu0 0.0
    %1211 = vmatprep.subr.mxu0 0.0
    %1212 = vmatpush1.msra.mxu0 0.0
    %1213 = vmatprep.subr.mxu0 0.0
    %1214 = vmatpush1.msra.mxu0 0.0
    %1215 = vmatprep.subr.mxu0 0.0
    %1216 = vmatpush1.msra.mxu0 0.0
    %1217 = vmatprep.subr.mxu0 0.0
    %1218 = vmatpush1.msra.mxu0 0.0
    %1219 = vmatprep.subr.mxu0 0.0
    %v1220 = vand.u32 %v75, 4294901760
    %1221 = vmatpush1.msra.mxu0 %v1220
    %1222 = vmatprep.subr.mxu0 0.0
    %v1223 = vand.u32 %v60, 4294901760
    %1224 = vmatpush1.msra.mxu0 %v1223
    %1225 = vmatprep.subr.mxu0 0.0
    %v1226 = vand.u32 %v59, 4294901760
    %1227 = vmatpush1.msra.mxu0 %v1226
    %1228 = vmatprep.subr.mxu0 0.0
    %v1229 = vand.u32 %v58, 4294901760
    %1230 = vmatpush1.msra.mxu0 %v1229
    %1231 = vmatprep.subr.mxu0 0.0
    %v1232 = vand.u32 %v57, 4294901760
    %1233 = vmatpush1.msra.mxu0 %v1232
    %1234 = vmatprep.subr.mxu0 0.0
    %1235 = vmatpush2.msra.mxu0 0.0
    %1236 = vmatprep.subr.mxu0 0.0
    %1237 = vmatpush2.msra.mxu0 0.0
    %1238 = vmatprep.subr.mxu0 0.0
    %1239 = vmatpush2.msra.mxu0 0.0
    %1240 = vmatprep.subr.mxu0 0.0
    %1241 = vmatpush2.msra.mxu0 0.0
    %1242 = vmatprep.subr.mxu0 0.0
    %1243 = vmatpush2.msra.mxu0 0.0
    %1244 = vmatprep.subr.mxu0 0.0
    %1245 = vmatpush2.msra.mxu0 0.0
    %1246 = vmatprep.subr.mxu0 0.0
    %1247 = vmatpush2.msra.mxu0 0.0
    %1248 = vmatprep.subr.mxu0 0.0
    %1249 = vmatpush2.msra.mxu0 0.0
    %1250 = vmatprep.subr.mxu0 0.0
    %1251 = vmatpush2.msra.mxu0 0.0
    %1252 = vmatprep.subr.mxu0 0.0
    %1253 = vmatpush2.msra.mxu0 0.0
    %1254 = vmatprep.subr.mxu0 0.0
    %1255 = vmatpush2.msra.mxu0 0.0
    %1256 = vmatprep.subr.mxu0 0.0
    %1257 = vmatpush2.msra.mxu0 0.0
    %1258 = vmatprep.subr.mxu0 0.0
    %1259 = vmatpush2.msra.mxu0 0.0
    %1260 = vmatprep.subr.mxu0 0.0
    %1261 = vmatpush2.msra.mxu0 0.0
    %1262 = vmatprep.subr.mxu0 0.0
    %1263 = vmatpush2.msra.mxu0 0.0
    %1264 = vmatprep.subr.mxu0 0.0
    %1265 = vmatpush2.msra.mxu0 0.0
    %1266 = vmatprep.mubr.f32.mxu0 0.0
    %v1267 = vand.u32 %v71, 4294901760
    %v1268 = vsub.f32 %v71, %v1267
    %v1269 = vand.u32 %v1268, 4294901760
    %1270 = vmatmul.mubr.f32.gmra.mxu0 %v1269
    %v1271 = vpop.f32.mrf.mxu0
    %v1272 = vadd.f32 %v1194, %v1271
    %v1273 = vpop.f32.mrf.mxu0
    %1274 = vdwg.mxu0
    %1275 = vmatprep.subr.mxu0 0.0
    %1276 = vmatpush1.msra.mxu0 0.0
    %1277 = vmatprep.subr.mxu0 0.0
    %1278 = vmatpush1.msra.mxu0 0.0
    %1279 = vmatprep.subr.mxu0 0.0
    %1280 = vmatpush1.msra.mxu0 0.0
    %1281 = vmatprep.subr.mxu0 0.0
    %1282 = vmatpush1.msra.mxu0 0.0
    %1283 = vmatprep.subr.mxu0 0.0
    %1284 = vmatpush1.msra.mxu0 0.0
    %1285 = vmatprep.subr.mxu0 0.0
    %1286 = vmatpush1.msra.mxu0 0.0
    %1287 = vmatprep.subr.mxu0 0.0
    %1288 = vmatpush1.msra.mxu0 0.0
    %1289 = vmatprep.subr.mxu0 0.0
    %1290 = vmatpush1.msra.mxu0 0.0
    %1291 = vmatprep.subr.mxu0 0.0
    %1292 = vmatpush1.msra.mxu0 0.0
    %1293 = vmatprep.subr.mxu0 0.0
    %1294 = vmatpush1.msra.mxu0 0.0
    %1295 = vmatprep.subr.mxu0 0.0
    %1296 = vmatpush1.msra.mxu0 0.0
    %1297 = vmatprep.subr.mxu0 0.0
    %v1298 = vand.u32 %v75, 4294901760
    %v1299 = vsub.f32 %v75, %v1298
    %v1300 = vand.u32 %v1299, 4294901760
    %1301 = vmatpush1.msra.mxu0 %v1300
    %1302 = vmatprep.subr.mxu0 0.0
    %v1303 = vand.u32 %v60, 4294901760
    %v1304 = vsub.f32 %v60, %v1303
    %v1305 = vand.u32 %v1304, 4294901760
    %1306 = vmatpush1.msra.mxu0 %v1305
    %1307 = vmatprep.subr.mxu0 0.0
    %v1308 = vand.u32 %v59, 4294901760
    %v1309 = vsub.f32 %v59, %v1308
    %v1310 = vand.u32 %v1309, 4294901760
    %1311 = vmatpush1.msra.mxu0 %v1310
    %1312 = vmatprep.subr.mxu0 0.0
    %v1313 = vand.u32 %v58, 4294901760
    %v1314 = vsub.f32 %v58, %v1313
    %v1315 = vand.u32 %v1314, 4294901760
    %1316 = vmatpush1.msra.mxu0 %v1315
    %1317 = vmatprep.subr.mxu0 0.0
    %v1318 = vand.u32 %v57, 4294901760
    %v1319 = vsub.f32 %v57, %v1318
    %v1320 = vand.u32 %v1319, 4294901760
    %1321 = vmatpush1.msra.mxu0 %v1320
    %1322 = vmatprep.subr.mxu0 0.0
    %1323 = vmatpush2.msra.mxu0 0.0
    %1324 = vmatprep.subr.mxu0 0.0
    %1325 = vmatpush2.msra.mxu0 0.0
    %1326 = vmatprep.subr.mxu0 0.0
    %1327 = vmatpush2.msra.mxu0 0.0
    %1328 = vmatprep.subr.mxu0 0.0
    %1329 = vmatpush2.msra.mxu0 0.0
    %1330 = vmatprep.subr.mxu0 0.0
    %1331 = vmatpush2.msra.mxu0 0.0
    %1332 = vmatprep.subr.mxu0 0.0
    %1333 = vmatpush2.msra.mxu0 0.0
    %1334 = vmatprep.subr.mxu0 0.0
    %1335 = vmatpush2.msra.mxu0 0.0
    %1336 = vmatprep.subr.mxu0 0.0
    %1337 = vmatpush2.msra.mxu0 0.0
    %1338 = vmatprep.subr.mxu0 0.0
    %1339 = vmatpush2.msra.mxu0 0.0
    %1340 = vmatprep.subr.mxu0 0.0
    %1341 = vmatpush2.msra.mxu0 0.0
    %1342 = vmatprep.subr.mxu0 0.0
    %1343 = vmatpush2.msra.mxu0 0.0
    %1344 = vmatprep.subr.mxu0 0.0
    %1345 = vmatpush2.msra.mxu0 0.0
    %1346 = vmatprep.subr.mxu0 0.0
    %1347 = vmatpush2.msra.mxu0 0.0
    %1348 = vmatprep.subr.mxu0 0.0
    %1349 = vmatpush2.msra.mxu0 0.0
    %1350 = vmatprep.subr.mxu0 0.0
    %1351 = vmatpush2.msra.mxu0 0.0
    %1352 = vmatprep.subr.mxu0 0.0
    %1353 = vmatpush2.msra.mxu0 0.0
    %1354 = vmatprep.mubr.f32.mxu0 0.0
    %v1355 = vand.u32 %v71, 4294901760
    %1356 = vmatmul.mubr.f32.gmra.mxu0 %v1355
    %v1357 = vpop.f32.mrf.mxu0
    %v1358 = vadd.f32 %v1272, %v1357
    %v1359 = vpop.f32.mrf.mxu0
    %1360 = vdwg.mxu0
    %1361 = vmatprep.subr.mxu0 0.0
    %1362 = vmatpush1.msra.mxu0 0.0
    %1363 = vmatprep.subr.mxu0 0.0
    %1364 = vmatpush1.msra.mxu0 0.0
    %1365 = vmatprep.subr.mxu0 0.0
    %1366 = vmatpush1.msra.mxu0 0.0
    %1367 = vmatprep.subr.mxu0 0.0
    %1368 = vmatpush1.msra.mxu0 0.0
    %1369 = vmatprep.subr.mxu0 0.0
    %1370 = vmatpush1.msra.mxu0 0.0
    %1371 = vmatprep.subr.mxu0 0.0
    %1372 = vmatpush1.msra.mxu0 0.0
    %1373 = vmatprep.subr.mxu0 0.0
    %1374 = vmatpush1.msra.mxu0 0.0
    %1375 = vmatprep.subr.mxu0 0.0
    %1376 = vmatpush1.msra.mxu0 0.0
    %1377 = vmatprep.subr.mxu0 0.0
    %1378 = vmatpush1.msra.mxu0 0.0
    %1379 = vmatprep.subr.mxu0 0.0
    %1380 = vmatpush1.msra.mxu0 0.0
    %1381 = vmatprep.subr.mxu0 0.0
    %1382 = vmatpush1.msra.mxu0 0.0
    %1383 = vmatprep.subr.mxu0 0.0
    %v1384 = vand.u32 %v75, 4294901760
    %1385 = vmatpush1.msra.mxu0 %v1384
    %1386 = vmatprep.subr.mxu0 0.0
    %v1387 = vand.u32 %v60, 4294901760
    %1388 = vmatpush1.msra.mxu0 %v1387
    %1389 = vmatprep.subr.mxu0 0.0
    %v1390 = vand.u32 %v59, 4294901760
    %1391 = vmatpush1.msra.mxu0 %v1390
    %1392 = vmatprep.subr.mxu0 0.0
    %v1393 = vand.u32 %v58, 4294901760
    %1394 = vmatpush1.msra.mxu0 %v1393
    %1395 = vmatprep.subr.mxu0 0.0
    %v1396 = vand.u32 %v57, 4294901760
    %1397 = vmatpush1.msra.mxu0 %v1396
    %1398 = vmatprep.subr.mxu0 0.0
    %1399 = vmatpush2.msra.mxu0 0.0
    %1400 = vmatprep.subr.mxu0 0.0
    %1401 = vmatpush2.msra.mxu0 0.0
    %1402 = vmatprep.subr.mxu0 0.0
    %1403 = vmatpush2.msra.mxu0 0.0
    %1404 = vmatprep.subr.mxu0 0.0
    %1405 = vmatpush2.msra.mxu0 0.0
    %1406 = vmatprep.subr.mxu0 0.0
    %1407 = vmatpush2.msra.mxu0 0.0
    %1408 = vmatprep.subr.mxu0 0.0
    %1409 = vmatpush2.msra.mxu0 0.0
    %1410 = vmatprep.subr.mxu0 0.0
    %1411 = vmatpush2.msra.mxu0 0.0
    %1412 = vmatprep.subr.mxu0 0.0
    %1413 = vmatpush2.msra.mxu0 0.0
    %1414 = vmatprep.subr.mxu0 0.0
    %1415 = vmatpush2.msra.mxu0 0.0
    %1416 = vmatprep.subr.mxu0 0.0
    %1417 = vmatpush2.msra.mxu0 0.0
    %1418 = vmatprep.subr.mxu0 0.0
    %1419 = vmatpush2.msra.mxu0 0.0
    %1420 = vmatprep.subr.mxu0 0.0
    %1421 = vmatpush2.msra.mxu0 0.0
    %1422 = vmatprep.subr.mxu0 0.0
    %1423 = vmatpush2.msra.mxu0 0.0
    %1424 = vmatprep.subr.mxu0 0.0
    %1425 = vmatpush2.msra.mxu0 0.0
    %1426 = vmatprep.subr.mxu0 0.0
    %1427 = vmatpush2.msra.mxu0 0.0
    %1428 = vmatprep.subr.mxu0 0.0
    %1429 = vmatpush2.msra.mxu0 0.0
    %1430 = vmatprep.mubr.f32.mxu0 0.0
    %v1431 = vand.u32 %v71, 4294901760
    %1432 = vmatmul.mubr.f32.gmra.mxu0 %v1431
    %v1433 = vpop.f32.mrf.mxu0
    %v1434 = vadd.f32 %v1358, %v1433
    %v1435 = vpop.f32.mrf.mxu0
    %1436 = vdwg.mxu0
    %v1437 = vmax.f32 %v1434, 0.0
    %v1438 = vld [vmem:[%s3] sm:$0x1]
    %s1439 = sld [smem:[#allocation2]]
    %v1440 = vstv %s1439
    %vm1441 = vcmask 97280
    %v1443 = vsel %vm1441, %v1438, 0
    %v1446 = vsel %vm1441, %v1437, 0
    %1448 = vmatprep.subr.mxu0 0.0
    %1449 = vmatpush1.xpose.msra.mxu0 0.0
    %1450 = vmatprep.subr.mxu0 0.0
    %1451 = vmatpush1.xpose.msra.mxu0 0.0
    %1452 = vmatprep.subr.mxu0 0.0
    %1453 = vmatpush1.xpose.msra.mxu0 0.0
    %1454 = vmatprep.subr.mxu0 0.0
    %1455 = vmatpush1.xpose.msra.mxu0 0.0
    %1456 = vmatprep.subr.mxu0 0.0
    %1457 = vmatpush1.xpose.msra.mxu0 0.0
    %1458 = vmatprep.subr.mxu0 0.0
    %1459 = vmatpush1.xpose.msra.mxu0 0.0
    %1460 = vmatprep.subr.mxu0 0.0
    %1461 = vmatpush1.xpose.msra.mxu0 0.0
    %1462 = vmatprep.subr.mxu0 0.0
    %1463 = vmatpush1.xpose.msra.mxu0 0.0
    %1464 = vmatprep.subr.mxu0 0.0
    %1465 = vmatpush1.xpose.msra.mxu0 0.0
    %1466 = vmatprep.subr.mxu0 0.0
    %1467 = vmatpush1.xpose.msra.mxu0 0.0
    %1468 = vmatprep.subr.mxu0 0.0
    %1469 = vmatpush1.xpose.msra.mxu0 0.0
    %1470 = vmatprep.subr.mxu0 0.0
    %1471 = vmatpush1.xpose.msra.mxu0 0.0
    %1472 = vmatprep.subr.mxu0 0.0
    %1473 = vmatpush1.xpose.msra.mxu0 0.0
    %1474 = vmatprep.subr.mxu0 0.0
    %1475 = vmatpush1.xpose.msra.mxu0 0.0
    %1476 = vmatprep.subr.mxu0 0.0
    %1477 = vmatpush1.xpose.msra.mxu0 0.0
    %1478 = vmatprep.subr.mxu0 0.0
    %v1479 = vand.u32 %v1446, 4294901760
    %1480 = vmatpush1.xpose.msra.mxu0 %v1479
    %1481 = vmatprep.subr.mxu0 0.0
    %1482 = vmatpush2.xpose.msra.mxu0 0.0
    %1483 = vmatprep.subr.mxu0 0.0
    %1484 = vmatpush2.xpose.msra.mxu0 0.0
    %1485 = vmatprep.subr.mxu0 0.0
    %1486 = vmatpush2.xpose.msra.mxu0 0.0
    %1487 = vmatprep.subr.mxu0 0.0
    %1488 = vmatpush2.xpose.msra.mxu0 0.0
    %1489 = vmatprep.subr.mxu0 0.0
    %1490 = vmatpush2.xpose.msra.mxu0 0.0
    %1491 = vmatprep.subr.mxu0 0.0
    %1492 = vmatpush2.xpose.msra.mxu0 0.0
    %1493 = vmatprep.subr.mxu0 0.0
    %1494 = vmatpush2.xpose.msra.mxu0 0.0
    %1495 = vmatprep.subr.mxu0 0.0
    %1496 = vmatpush2.xpose.msra.mxu0 0.0
    %1497 = vmatprep.subr.mxu0 0.0
    %1498 = vmatpush2.xpose.msra.mxu0 0.0
    %1499 = vmatprep.subr.mxu0 0.0
    %1500 = vmatpush2.xpose.msra.mxu0 0.0
    %1501 = vmatprep.subr.mxu0 0.0
    %1502 = vmatpush2.xpose.msra.mxu0 0.0
    %1503 = vmatprep.subr.mxu0 0.0
    %1504 = vmatpush2.xpose.msra.mxu0 0.0
    %1505 = vmatprep.subr.mxu0 0.0
    %1506 = vmatpush2.xpose.msra.mxu0 0.0
    %1507 = vmatprep.subr.mxu0 0.0
    %1508 = vmatpush2.xpose.msra.mxu0 0.0
    %1509 = vmatprep.subr.mxu0 0.0
    %1510 = vmatpush2.xpose.msra.mxu0 0.0
    %1511 = vmatprep.subr.mxu0 0.0
    %1512 = vmatpush2.xpose.msra.mxu0 0.0
    %1513 = vmatprep.mubr.f32.mxu0 0.0
    %v1514 = vand.u32 %v1443, 4294901760
    %v1515 = vsub.f32 %v1443, %v1514
    %v1516 = vand.u32 %v1515, 4294901760
    %v1517 = vsub.f32 %v1515, %v1516
    %v1518 = vand.u32 %v1517, 4294901760
    %1519 = vmatmul.mubr.f32.gmra.mxu0 %v1518
    %v1520 = vpop.f32.mrf.mxu0
    %v1521 = vadd.f32 %v1440, %v1520
    %v1522 = vpop.f32.mrf.mxu0
    %1523 = vdwg.mxu0
    %1524 = vmatprep.subr.mxu0 0.0
    %1525 = vmatpush1.xpose.msra.mxu0 0.0
    %1526 = vmatprep.subr.mxu0 0.0
    %1527 = vmatpush1.xpose.msra.mxu0 0.0
    %1528 = vmatprep.subr.mxu0 0.0
    %1529 = vmatpush1.xpose.msra.mxu0 0.0
    %1530 = vmatprep.subr.mxu0 0.0
    %1531 = vmatpush1.xpose.msra.mxu0 0.0
    %1532 = vmatprep.subr.mxu0 0.0
    %1533 = vmatpush1.xpose.msra.mxu0 0.0
    %1534 = vmatprep.subr.mxu0 0.0
    %1535 = vmatpush1.xpose.msra.mxu0 0.0
    %1536 = vmatprep.subr.mxu0 0.0
    %1537 = vmatpush1.xpose.msra.mxu0 0.0
    %1538 = vmatprep.subr.mxu0 0.0
    %1539 = vmatpush1.xpose.msra.mxu0 0.0
    %1540 = vmatprep.subr.mxu0 0.0
    %1541 = vmatpush1.xpose.msra.mxu0 0.0
    %1542 = vmatprep.subr.mxu0 0.0
    %1543 = vmatpush1.xpose.msra.mxu0 0.0
    %1544 = vmatprep.subr.mxu0 0.0
    %1545 = vmatpush1.xpose.msra.mxu0 0.0
    %1546 = vmatprep.subr.mxu0 0.0
    %1547 = vmatpush1.xpose.msra.mxu0 0.0
    %1548 = vmatprep.subr.mxu0 0.0
    %1549 = vmatpush1.xpose.msra.mxu0 0.0
    %1550 = vmatprep.subr.mxu0 0.0
    %1551 = vmatpush1.xpose.msra.mxu0 0.0
    %1552 = vmatprep.subr.mxu0 0.0
    %1553 = vmatpush1.xpose.msra.mxu0 0.0
    %1554 = vmatprep.subr.mxu0 0.0
    %v1555 = vand.u32 %v1446, 4294901760
    %v1556 = vsub.f32 %v1446, %v1555
    %v1557 = vand.u32 %v1556, 4294901760
    %v1558 = vsub.f32 %v1556, %v1557
    %v1559 = vand.u32 %v1558, 4294901760
    %1560 = vmatpush1.xpose.msra.mxu0 %v1559
    %1561 = vmatprep.subr.mxu0 0.0
    %1562 = vmatpush2.xpose.msra.mxu0 0.0
    %1563 = vmatprep.subr.mxu0 0.0
    %1564 = vmatpush2.xpose.msra.mxu0 0.0
    %1565 = vmatprep.subr.mxu0 0.0
    %1566 = vmatpush2.xpose.msra.mxu0 0.0
    %1567 = vmatprep.subr.mxu0 0.0
    %1568 = vmatpush2.xpose.msra.mxu0 0.0
    %1569 = vmatprep.subr.mxu0 0.0
    %1570 = vmatpush2.xpose.msra.mxu0 0.0
    %1571 = vmatprep.subr.mxu0 0.0
    %1572 = vmatpush2.xpose.msra.mxu0 0.0
    %1573 = vmatprep.subr.mxu0 0.0
    %1574 = vmatpush2.xpose.msra.mxu0 0.0
    %1575 = vmatprep.subr.mxu0 0.0
    %1576 = vmatpush2.xpose.msra.mxu0 0.0
    %1577 = vmatprep.subr.mxu0 0.0
    %1578 = vmatpush2.xpose.msra.mxu0 0.0
    %1579 = vmatprep.subr.mxu0 0.0
    %1580 = vmatpush2.xpose.msra.mxu0 0.0
    %1581 = vmatprep.subr.mxu0 0.0
    %1582 = vmatpush2.xpose.msra.mxu0 0.0
    %1583 = vmatprep.subr.mxu0 0.0
    %1584 = vmatpush2.xpose.msra.mxu0 0.0
    %1585 = vmatprep.subr.mxu0 0.0
    %1586 = vmatpush2.xpose.msra.mxu0 0.0
    %1587 = vmatprep.subr.mxu0 0.0
    %1588 = vmatpush2.xpose.msra.mxu0 0.0
    %1589 = vmatprep.subr.mxu0 0.0
    %1590 = vmatpush2.xpose.msra.mxu0 0.0
    %1591 = vmatprep.subr.mxu0 0.0
    %1592 = vmatpush2.xpose.msra.mxu0 0.0
    %1593 = vmatprep.mubr.f32.mxu0 0.0
    %v1594 = vand.u32 %v1443, 4294901760
    %1595 = vmatmul.mubr.f32.gmra.mxu0 %v1594
    %v1596 = vpop.f32.mrf.mxu0
    %v1597 = vadd.f32 %v1521, %v1596
    %v1598 = vpop.f32.mrf.mxu0
    %1599 = vdwg.mxu0
    %1600 = vmatprep.subr.mxu0 0.0
    %1601 = vmatpush1.xpose.msra.mxu0 0.0
    %1602 = vmatprep.subr.mxu0 0.0
    %1603 = vmatpush1.xpose.msra.mxu0 0.0
    %1604 = vmatprep.subr.mxu0 0.0
    %1605 = vmatpush1.xpose.msra.mxu0 0.0
    %1606 = vmatprep.subr.mxu0 0.0
    %1607 = vmatpush1.xpose.msra.mxu0 0.0
    %1608 = vmatprep.subr.mxu0 0.0
    %1609 = vmatpush1.xpose.msra.mxu0 0.0
    %1610 = vmatprep.subr.mxu0 0.0
    %1611 = vmatpush1.xpose.msra.mxu0 0.0
    %1612 = vmatprep.subr.mxu0 0.0
    %1613 = vmatpush1.xpose.msra.mxu0 0.0
    %1614 = vmatprep.subr.mxu0 0.0
    %1615 = vmatpush1.xpose.msra.mxu0 0.0
    %1616 = vmatprep.subr.mxu0 0.0
    %1617 = vmatpush1.xpose.msra.mxu0 0.0
    %1618 = vmatprep.subr.mxu0 0.0
    %1619 = vmatpush1.xpose.msra.mxu0 0.0
    %1620 = vmatprep.subr.mxu0 0.0
    %1621 = vmatpush1.xpose.msra.mxu0 0.0
    %1622 = vmatprep.subr.mxu0 0.0
    %1623 = vmatpush1.xpose.msra.mxu0 0.0
    %1624 = vmatprep.subr.mxu0 0.0
    %1625 = vmatpush1.xpose.msra.mxu0 0.0
    %1626 = vmatprep.subr.mxu0 0.0
    %1627 = vmatpush1.xpose.msra.mxu0 0.0
    %1628 = vmatprep.subr.mxu0 0.0
    %1629 = vmatpush1.xpose.msra.mxu0 0.0
    %1630 = vmatprep.subr.mxu0 0.0
    %v1631 = vand.u32 %v1446, 4294901760
    %v1632 = vsub.f32 %v1446, %v1631
    %1633 = vmatpush1.xpose.msra.mxu0 %v1632
    %1634 = vmatprep.subr.mxu0 0.0
    %1635 = vmatpush2.xpose.msra.mxu0 0.0
    %1636 = vmatprep.subr.mxu0 0.0
    %1637 = vmatpush2.xpose.msra.mxu0 0.0
    %1638 = vmatprep.subr.mxu0 0.0
    %1639 = vmatpush2.xpose.msra.mxu0 0.0
    %1640 = vmatprep.subr.mxu0 0.0
    %1641 = vmatpush2.xpose.msra.mxu0 0.0
    %1642 = vmatprep.subr.mxu0 0.0
    %1643 = vmatpush2.xpose.msra.mxu0 0.0
    %1644 = vmatprep.subr.mxu0 0.0
    %1645 = vmatpush2.xpose.msra.mxu0 0.0
    %1646 = vmatprep.subr.mxu0 0.0
    %1647 = vmatpush2.xpose.msra.mxu0 0.0
    %1648 = vmatprep.subr.mxu0 0.0
    %1649 = vmatpush2.xpose.msra.mxu0 0.0
    %1650 = vmatprep.subr.mxu0 0.0
    %1651 = vmatpush2.xpose.msra.mxu0 0.0
    %1652 = vmatprep.subr.mxu0 0.0
    %1653 = vmatpush2.xpose.msra.mxu0 0.0
    %1654 = vmatprep.subr.mxu0 0.0
    %1655 = vmatpush2.xpose.msra.mxu0 0.0
    %1656 = vmatprep.subr.mxu0 0.0
    %1657 = vmatpush2.xpose.msra.mxu0 0.0
    %1658 = vmatprep.subr.mxu0 0.0
    %1659 = vmatpush2.xpose.msra.mxu0 0.0
    %1660 = vmatprep.subr.mxu0 0.0
    %1661 = vmatpush2.xpose.msra.mxu0 0.0
    %1662 = vmatprep.subr.mxu0 0.0
    %1663 = vmatpush2.xpose.msra.mxu0 0.0
    %1664 = vmatprep.subr.mxu0 0.0
    %1665 = vmatpush2.xpose.msra.mxu0 0.0
    %1666 = vmatprep.mubr.f32.mxu0 0.0
    %v1667 = vand.u32 %v1443, 4294901760
    %v1668 = vsub.f32 %v1443, %v1667
    %1669 = vmatmul.mubr.f32.gmra.mxu0 %v1668
    %v1670 = vpop.f32.mrf.mxu0
    %v1671 = vadd.f32 %v1597, %v1670
    %v1672 = vpop.f32.mrf.mxu0
    %1673 = vdwg.mxu0
    %1674 = vmatprep.subr.mxu0 0.0
    %1675 = vmatpush1.xpose.msra.mxu0 0.0
    %1676 = vmatprep.subr.mxu0 0.0
    %1677 = vmatpush1.xpose.msra.mxu0 0.0
    %1678 = vmatprep.subr.mxu0 0.0
    %1679 = vmatpush1.xpose.msra.mxu0 0.0
    %1680 = vmatprep.subr.mxu0 0.0
    %1681 = vmatpush1.xpose.msra.mxu0 0.0
    %1682 = vmatprep.subr.mxu0 0.0
    %1683 = vmatpush1.xpose.msra.mxu0 0.0
    %1684 = vmatprep.subr.mxu0 0.0
    %1685 = vmatpush1.xpose.msra.mxu0 0.0
    %1686 = vmatprep.subr.mxu0 0.0
    %1687 = vmatpush1.xpose.msra.mxu0 0.0
    %1688 = vmatprep.subr.mxu0 0.0
    %1689 = vmatpush1.xpose.msra.mxu0 0.0
    %1690 = vmatprep.subr.mxu0 0.0
    %1691 = vmatpush1.xpose.msra.mxu0 0.0
    %1692 = vmatprep.subr.mxu0 0.0
    %1693 = vmatpush1.xpose.msra.mxu0 0.0
    %1694 = vmatprep.subr.mxu0 0.0
    %1695 = vmatpush1.xpose.msra.mxu0 0.0
    %1696 = vmatprep.subr.mxu0 0.0
    %1697 = vmatpush1.xpose.msra.mxu0 0.0
    %1698 = vmatprep.subr.mxu0 0.0
    %1699 = vmatpush1.xpose.msra.mxu0 0.0
    %1700 = vmatprep.subr.mxu0 0.0
    %1701 = vmatpush1.xpose.msra.mxu0 0.0
    %1702 = vmatprep.subr.mxu0 0.0
    %1703 = vmatpush1.xpose.msra.mxu0 0.0
    %1704 = vmatprep.subr.mxu0 0.0
    %v1705 = vand.u32 %v1446, 4294901760
    %1706 = vmatpush1.xpose.msra.mxu0 %v1705
    %1707 = vmatprep.subr.mxu0 0.0
    %1708 = vmatpush2.xpose.msra.mxu0 0.0
    %1709 = vmatprep.subr.mxu0 0.0
    %1710 = vmatpush2.xpose.msra.mxu0 0.0
    %1711 = vmatprep.subr.mxu0 0.0
    %1712 = vmatpush2.xpose.msra.mxu0 0.0
    %1713 = vmatprep.subr.mxu0 0.0
    %1714 = vmatpush2.xpose.msra.mxu0 0.0
    %1715 = vmatprep.subr.mxu0 0.0
    %1716 = vmatpush2.xpose.msra.mxu0 0.0
    %1717 = vmatprep.subr.mxu0 0.0
    %1718 = vmatpush2.xpose.msra.mxu0 0.0
    %1719 = vmatprep.subr.mxu0 0.0
    %1720 = vmatpush2.xpose.msra.mxu0 0.0
    %1721 = vmatprep.subr.mxu0 0.0
    %1722 = vmatpush2.xpose.msra.mxu0 0.0
    %1723 = vmatprep.subr.mxu0 0.0
    %1724 = vmatpush2.xpose.msra.mxu0 0.0
    %1725 = vmatprep.subr.mxu0 0.0
    %1726 = vmatpush2.xpose.msra.mxu0 0.0
    %1727 = vmatprep.subr.mxu0 0.0
    %1728 = vmatpush2.xpose.msra.mxu0 0.0
    %1729 = vmatprep.subr.mxu0 0.0
    %1730 = vmatpush2.xpose.msra.mxu0 0.0
    %1731 = vmatprep.subr.mxu0 0.0
    %1732 = vmatpush2.xpose.msra.mxu0 0.0
    %1733 = vmatprep.subr.mxu0 0.0
    %1734 = vmatpush2.xpose.msra.mxu0 0.0
    %1735 = vmatprep.subr.mxu0 0.0
    %1736 = vmatpush2.xpose.msra.mxu0 0.0
    %1737 = vmatprep.subr.mxu0 0.0
    %1738 = vmatpush2.xpose.msra.mxu0 0.0
    %1739 = vmatprep.mubr.f32.mxu0 0.0
    %v1740 = vand.u32 %v1443, 4294901760
    %v1741 = vsub.f32 %v1443, %v1740
    %v1742 = vand.u32 %v1741, 4294901760
    %1743 = vmatmul.mubr.f32.gmra.mxu0 %v1742
    %v1744 = vpop.f32.mrf.mxu0
    %v1745 = vadd.f32 %v1671, %v1744
    %v1746 = vpop.f32.mrf.mxu0
    %1747 = vdwg.mxu0
    %1748 = vmatprep.subr.mxu0 0.0
    %1749 = vmatpush1.xpose.msra.mxu0 0.0
    %1750 = vmatprep.subr.mxu0 0.0
    %1751 = vmatpush1.xpose.msra.mxu0 0.0
    %1752 = vmatprep.subr.mxu0 0.0
    %1753 = vmatpush1.xpose.msra.mxu0 0.0
    %1754 = vmatprep.subr.mxu0 0.0
    %1755 = vmatpush1.xpose.msra.mxu0 0.0
    %1756 = vmatprep.subr.mxu0 0.0
    %1757 = vmatpush1.xpose.msra.mxu0 0.0
    %1758 = vmatprep.subr.mxu0 0.0
    %1759 = vmatpush1.xpose.msra.mxu0 0.0
    %1760 = vmatprep.subr.mxu0 0.0
    %1761 = vmatpush1.xpose.msra.mxu0 0.0
    %1762 = vmatprep.subr.mxu0 0.0
    %1763 = vmatpush1.xpose.msra.mxu0 0.0
    %1764 = vmatprep.subr.mxu0 0.0
    %1765 = vmatpush1.xpose.msra.mxu0 0.0
    %1766 = vmatprep.subr.mxu0 0.0
    %1767 = vmatpush1.xpose.msra.mxu0 0.0
    %1768 = vmatprep.subr.mxu0 0.0
    %1769 = vmatpush1.xpose.msra.mxu0 0.0
    %1770 = vmatprep.subr.mxu0 0.0
    %1771 = vmatpush1.xpose.msra.mxu0 0.0
    %1772 = vmatprep.subr.mxu0 0.0
    %1773 = vmatpush1.xpose.msra.mxu0 0.0
    %1774 = vmatprep.subr.mxu0 0.0
    %1775 = vmatpush1.xpose.msra.mxu0 0.0
    %1776 = vmatprep.subr.mxu0 0.0
    %1777 = vmatpush1.xpose.msra.mxu0 0.0
    %1778 = vmatprep.subr.mxu0 0.0
    %v1779 = vand.u32 %v1446, 4294901760
    %v1780 = vsub.f32 %v1446, %v1779
    %v1781 = vand.u32 %v1780, 4294901760
    %1782 = vmatpush1.xpose.msra.mxu0 %v1781
    %1783 = vmatprep.subr.mxu0 0.0
    %1784 = vmatpush2.xpose.msra.mxu0 0.0
    %1785 = vmatprep.subr.mxu0 0.0
    %1786 = vmatpush2.xpose.msra.mxu0 0.0
    %1787 = vmatprep.subr.mxu0 0.0
    %1788 = vmatpush2.xpose.msra.mxu0 0.0
    %1789 = vmatprep.subr.mxu0 0.0
    %1790 = vmatpush2.xpose.msra.mxu0 0.0
    %1791 = vmatprep.subr.mxu0 0.0
    %1792 = vmatpush2.xpose.msra.mxu0 0.0
    %1793 = vmatprep.subr.mxu0 0.0
    %1794 = vmatpush2.xpose.msra.mxu0 0.0
    %1795 = vmatprep.subr.mxu0 0.0
    %1796 = vmatpush2.xpose.msra.mxu0 0.0
    %1797 = vmatprep.subr.mxu0 0.0
    %1798 = vmatpush2.xpose.msra.mxu0 0.0
    %1799 = vmatprep.subr.mxu0 0.0
    %1800 = vmatpush2.xpose.msra.mxu0 0.0
    %1801 = vmatprep.subr.mxu0 0.0
    %1802 = vmatpush2.xpose.msra.mxu0 0.0
    %1803 = vmatprep.subr.mxu0 0.0
    %1804 = vmatpush2.xpose.msra.mxu0 0.0
    %1805 = vmatprep.subr.mxu0 0.0
    %1806 = vmatpush2.xpose.msra.mxu0 0.0
    %1807 = vmatprep.subr.mxu0 0.0
    %1808 = vmatpush2.xpose.msra.mxu0 0.0
    %1809 = vmatprep.subr.mxu0 0.0
    %1810 = vmatpush2.xpose.msra.mxu0 0.0
    %1811 = vmatprep.subr.mxu0 0.0
    %1812 = vmatpush2.xpose.msra.mxu0 0.0
    %1813 = vmatprep.subr.mxu0 0.0
    %1814 = vmatpush2.xpose.msra.mxu0 0.0
    %1815 = vmatprep.mubr.f32.mxu0 0.0
    %v1816 = vand.u32 %v1443, 4294901760
    %1817 = vmatmul.mubr.f32.gmra.mxu0 %v1816
    %v1818 = vpop.f32.mrf.mxu0
    %v1819 = vadd.f32 %v1745, %v1818
    %v1820 = vpop.f32.mrf.mxu0
    %1821 = vdwg.mxu0
    %1822 = vmatprep.subr.mxu0 0.0
    %1823 = vmatpush1.xpose.msra.mxu0 0.0
    %1824 = vmatprep.subr.mxu0 0.0
    %1825 = vmatpush1.xpose.msra.mxu0 0.0
    %1826 = vmatprep.subr.mxu0 0.0
    %1827 = vmatpush1.xpose.msra.mxu0 0.0
    %1828 = vmatprep.subr.mxu0 0.0
    %1829 = vmatpush1.xpose.msra.mxu0 0.0
    %1830 = vmatprep.subr.mxu0 0.0
    %1831 = vmatpush1.xpose.msra.mxu0 0.0
    %1832 = vmatprep.subr.mxu0 0.0
    %1833 = vmatpush1.xpose.msra.mxu0 0.0
    %1834 = vmatprep.subr.mxu0 0.0
    %1835 = vmatpush1.xpose.msra.mxu0 0.0
    %1836 = vmatprep.subr.mxu0 0.0
    %1837 = vmatpush1.xpose.msra.mxu0 0.0
    %1838 = vmatprep.subr.mxu0 0.0
    %1839 = vmatpush1.xpose.msra.mxu0 0.0
    %1840 = vmatprep.subr.mxu0 0.0
    %1841 = vmatpush1.xpose.msra.mxu0 0.0
    %1842 = vmatprep.subr.mxu0 0.0
    %1843 = vmatpush1.xpose.msra.mxu0 0.0
    %1844 = vmatprep.subr.mxu0 0.0
    %1845 = vmatpush1.xpose.msra.mxu0 0.0
    %1846 = vmatprep.subr.mxu0 0.0
    %1847 = vmatpush1.xpose.msra.mxu0 0.0
    %1848 = vmatprep.subr.mxu0 0.0
    %1849 = vmatpush1.xpose.msra.mxu0 0.0
    %1850 = vmatprep.subr.mxu0 0.0
    %1851 = vmatpush1.xpose.msra.mxu0 0.0
    %1852 = vmatprep.subr.mxu0 0.0
    %v1853 = vand.u32 %v1446, 4294901760
    %1854 = vmatpush1.xpose.msra.mxu0 %v1853
    %1855 = vmatprep.subr.mxu0 0.0
    %1856 = vmatpush2.xpose.msra.mxu0 0.0
    %1857 = vmatprep.subr.mxu0 0.0
    %1858 = vmatpush2.xpose.msra.mxu0 0.0
    %1859 = vmatprep.subr.mxu0 0.0
    %1860 = vmatpush2.xpose.msra.mxu0 0.0
    %1861 = vmatprep.subr.mxu0 0.0
    %1862 = vmatpush2.xpose.msra.mxu0 0.0
    %1863 = vmatprep.subr.mxu0 0.0
    %1864 = vmatpush2.xpose.msra.mxu0 0.0
    %1865 = vmatprep.subr.mxu0 0.0
    %1866 = vmatpush2.xpose.msra.mxu0 0.0
    %1867 = vmatprep.subr.mxu0 0.0
    %1868 = vmatpush2.xpose.msra.mxu0 0.0
    %1869 = vmatprep.subr.mxu0 0.0
    %1870 = vmatpush2.xpose.msra.mxu0 0.0
    %1871 = vmatprep.subr.mxu0 0.0
    %1872 = vmatpush2.xpose.msra.mxu0 0.0
    %1873 = vmatprep.subr.mxu0 0.0
    %1874 = vmatpush2.xpose.msra.mxu0 0.0
    %1875 = vmatprep.subr.mxu0 0.0
    %1876 = vmatpush2.xpose.msra.mxu0 0.0
    %1877 = vmatprep.subr.mxu0 0.0
    %1878 = vmatpush2.xpose.msra.mxu0 0.0
    %1879 = vmatprep.subr.mxu0 0.0
    %1880 = vmatpush2.xpose.msra.mxu0 0.0
    %1881 = vmatprep.subr.mxu0 0.0
    %1882 = vmatpush2.xpose.msra.mxu0 0.0
    %1883 = vmatprep.subr.mxu0 0.0
    %1884 = vmatpush2.xpose.msra.mxu0 0.0
    %1885 = vmatprep.subr.mxu0 0.0
    %1886 = vmatpush2.xpose.msra.mxu0 0.0
    %1887 = vmatprep.mubr.f32.mxu0 0.0
    %v1888 = vand.u32 %v1443, 4294901760
    %1889 = vmatmul.mubr.f32.gmra.mxu0 %v1888
    %v1890 = vpop.f32.mrf.mxu0
    %v1891 = vadd.f32 %v1819, %v1890
    %v1892 = vpop.f32.mrf.mxu0
    %1893 = vdwg.mxu0
    %v1894 = vxor.u32 %v1891, 2147483648
    %v1895 = vmul.f32 %v1894, 1.442695
    %v1896 = vpow.pop %v1895
    %v1897 = vadd.f32 %v1896, 1.0
    %v1898 = vrcp.pop %v1897
    %v1899 = vmul.f32 1.0, %v1898
    %vm1900 = vcmask 57344
    %1901 = vst.msk [vmem:[#allocation3] sm:$0x1] %vm1900, %v1899
    // Predicated region
    $region22: #{accept_net_forward.1} parent=1 // pred_check
      _
    $region23: #{accept_net_forward.1} parent=1 // pred_check_branch
      %1903 = sbr.rel (0) target = $region25
    $region24: #{accept_net_forward.1} parent=1 // pred_region
      %s1905 = ssub.s32 16, 16
      %1906 = vsyncadd [#allocation4], %s1905
      %s1908 = sshll.u32 [#allocation3], 4
      %s1909 = int_to_ptr.vmem [resolvable:$true] %s1908
      %1911 = dma.vmem_to_hbm [thread:$0]  %s1909, 16, %s5, [#allocation4]
    $region25: #{accept_net_forward.1} parent=1 // pred_fallthru
      _
    // Predicated region
    $region26: #{accept_net_forward.1} parent=1 // pred_check
      _
    $region27: #{accept_net_forward.1} parent=1 // pred_check_branch
      %1913 = sbr.rel (0) target = $region29
    $region28: #{accept_net_forward.1} parent=1 // pred_region
      %1914 = dma.done [#allocation4], 16
    $region29: #{accept_net_forward.1} parent=1 // pred_fallthru
      _
    %1915 = vsyncpa [#allocation4], 1

</llo_original>
